<compile_context>
chip_gen: v6e
topology: v6e:2x2x1
jax: 0.10.0
libtpu: 0.0.40
codegen_flags: <defaults>
</compile_context>

<pallas_src>
import functools

import jax
import jax.numpy as jnp
from jax.experimental import pallas as pl
from jax.experimental.pallas import tpu as pltpu


def _gru_fusion_kernel(x_ref, wih_ref, whh_ref, bih_ref, bhh_ref,
                       w1_ref, b1_ref, w2_ref, b2_ref, out_ref,
                       *, hid, seq_len, batch):
    B, T = batch, seq_len
    f32 = jnp.float32

    # ---- Hoisted input-gate pre-activations (independent of h) -----------
    # x_ref is time-major flat: row t*B + b. One batched matmul per gate keeps
    # each result lane-aligned (width = hid) and off the recurrent chain.
    x_all = x_ref[...]                                               # (T*B, inp)
    # Fold b_hh into the hoisted term for the r/z gates (added unconditionally
    # every step). The n-gate's b_hh must stay inside the r*(...) term.
    gi_r = (jnp.dot(x_all, wih_ref[0], preferred_element_type=f32)
            + (bih_ref[0] + bhh_ref[0]))
    gi_z = (jnp.dot(x_all, wih_ref[1], preferred_element_type=f32)
            + (bih_ref[1] + bhh_ref[1]))
    gi_n = jnp.dot(x_all, wih_ref[2], preferred_element_type=f32) + bih_ref[2]

    w_hh_r, w_hh_z, w_hh_n = whh_ref[0], whh_ref[1], whh_ref[2]      # (hid, hid)
    b_hh_n = bhh_ref[2]                                              # (1, hid)

    # ---- Recurrence: fully unrolled (seq_len small & static) -------------
    # t = 0 specialized: h0 == 0  =>  h @ W_hh == 0 and z*h == 0.
    r0 = jax.nn.sigmoid(gi_r[0:B, :])
    z0 = jax.nn.sigmoid(gi_z[0:B, :])
    n0 = jnp.tanh(gi_n[0:B, :] + r0 * b_hh_n)
    h = n0 - z0 * n0                                                 # (1-z0)*n0

    for t in range(1, T):
        lo = t * B                                                   # static
        gh_r = jnp.dot(h, w_hh_r, preferred_element_type=f32)
        gh_z = jnp.dot(h, w_hh_z, preferred_element_type=f32)
        gh_n = jnp.dot(h, w_hh_n, preferred_element_type=f32) + b_hh_n
        r = jax.nn.sigmoid(gi_r[lo:lo + B, :] + gh_r)
        z = jax.nn.sigmoid(gi_z[lo:lo + B, :] + gh_z)
        n = jnp.tanh(gi_n[lo:lo + B, :] + r * gh_n)
        h = n + z * (h - n)                                          # (1-z)*n + z*h

    # ---- Classifier head: straight-line epilogue --------------------------
    # TODO(synk): dropout treated as identity (inference mode).
    o1 = jnp.dot(h, w1_ref[...], preferred_element_type=f32) + b1_ref[...]
    o1 = jnp.maximum(o1, 0.0)                                        # act = ReLU
    o2 = jnp.dot(o1, w2_ref[...], preferred_element_type=f32) + b2_ref[...]
    # LogSoftmax over dim=1
    m = jnp.max(o2, axis=1, keepdims=True)
    lse = jnp.log(jnp.sum(jnp.exp(o2 - m), axis=1, keepdims=True)) + m
    out_ref[...] = o2 - lse


def fusion_model_gru_forward(x, params, *, seq_len):
    """x: (batch*seq_len, inp) float32.  Returns (log_probs (B, num_cls), B)."""
    inp = x.shape[1]
    current_batch = x.shape[0] // seq_len
    B = current_batch
    hid = params["w_hh"].shape[-1]
    out_dim = params["w1"].shape[1]
    num_cls = params["w2"].shape[1]

    # (batch*seq, inp) -> (batch, seq, inp) -> time-major flat (seq*batch, inp).
    # Single tiny XLA rearrangement done once; keeps every in-kernel tensor 2D
    # so per-timestep extraction is a contiguous static sublane slice.
    x_tm = jnp.transpose(x.reshape(B, seq_len, inp), (1, 0, 2)).reshape(seq_len * B, inp)

    full = lambda shape: pl.BlockSpec(shape, lambda i: tuple(0 for _ in shape))
    kernel = functools.partial(_gru_fusion_kernel, hid=hid, seq_len=seq_len, batch=B)

    log_probs = pl.pallas_call(
        kernel,
        out_shape=jax.ShapeDtypeStruct((B, num_cls), jnp.float32),
        grid_spec=pltpu.PrefetchScalarGridSpec(
            num_scalar_prefetch=0,
            grid=(1,),                                   # single invocation
            in_specs=[
                full((seq_len * B, inp)),                # x, time-major flat
                full((3, inp, hid)),                     # W_ih per gate [r,z,n]
                full((3, hid, hid)),                     # W_hh per gate
                full((3, 1, hid)),                       # b_ih per gate
                full((3, 1, hid)),                       # b_hh per gate
                full((hid, out_dim)),                    # fc1 W^T
                full((1, out_dim)),                      # fc1 b
                full((out_dim, num_cls)),                # fc2 W^T
                full((1, num_cls)),                      # fc2 b
            ],
            out_specs=pl.BlockSpec((B, num_cls), lambda i: (0, 0)),
        ),
        compiler_params=pltpu.CompilerParams(
            dimension_semantics=("arbitrary",)),
    )(x_tm,
      params["w_ih"], params["w_hh"],
      params["b_ih"], params["b_hh"],
      params["w1"], params["b1"],
      params["w2"], params["b2"])

    return log_probs, current_batch


def init_params(key, inp, hid, out_dim, num_cls):
    """Deterministic parameter init (PyTorch-like uniform(-1/sqrt(hid), ...))."""
    ks = jax.random.split(key, 8)
    s = 1.0 / jnp.sqrt(jnp.float32(hid))
    so = 1.0 / jnp.sqrt(jnp.float32(out_dim))
    u = lambda k, shape, sc: jax.random.uniform(k, shape, jnp.float32, -sc, sc)
    return {
        # gate-major, pre-transposed layout: (gate, in_features, out_features)
        # gate order [r, z, n] to match torch.nn.GRU
        "w_ih": u(ks[0], (3, inp, hid), s),
        "w_hh": u(ks[1], (3, hid, hid), s),
        "b_ih": u(ks[2], (3, 1, hid), s),
        "b_hh": u(ks[3], (3, 1, hid), s),
        "w1":   u(ks[4], (hid, out_dim), s),
        "b1":   u(ks[5], (1, out_dim), s),
        "w2":   u(ks[6], (out_dim, num_cls), so),
        "b2":   u(ks[7], (1, num_cls), so),
    }


def _reference_forward(x, params, *, seq_len):
    """Pure-JAX reference (same math) for a sanity check."""
    inp = x.shape[1]
    B = x.shape[0] // seq_len
    hid = params["w_hh"].shape[-1]
    xs = jnp.transpose(x.reshape(B, seq_len, inp), (1, 0, 2))  # (T, B, inp)

    w_ih, w_hh = params["w_ih"], params["w_hh"]
    b_ih, b_hh = params["b_ih"], params["b_hh"]

    def step(h, x_t):
        r = jax.nn.sigmoid(x_t @ w_ih[0] + b_ih[0] + h @ w_hh[0] + b_hh[0])
        z = jax.nn.sigmoid(x_t @ w_ih[1] + b_ih[1] + h @ w_hh[1] + b_hh[1])
        n = jnp.tanh(x_t @ w_ih[2] + b_ih[2] + r * (h @ w_hh[2] + b_hh[2]))
        return (1.0 - z) * n + z * h, None

    h_last, _ = jax.lax.scan(step, jnp.zeros((B, hid), jnp.float32), xs)
    o1 = jnp.maximum(h_last @ params["w1"] + params["b1"], 0.0)
    o2 = o1 @ params["w2"] + params["b2"]
    return jax.nn.log_softmax(o2, axis=1), B


if __name__ == "__main__":
    # Small shapes consistent with the module:
    #   inp=4, hid=32, out=16, num_cls=4, seq_len=8, batch=2
    INP, HID, OUT, NUM_CLS, SEQ_LEN, BATCH = 4, 32, 16, 4, 8, 2

    key = jax.random.PRNGKey(0)
    k_x, k_p = jax.random.split(key)
    params = init_params(k_p, INP, HID, OUT, NUM_CLS)
    # PyTorch input convention: (batch*seq_len, inp)
    x = jax.random.normal(k_x, (BATCH * SEQ_LEN, INP), jnp.float32)

    y_pred, current_batch = fusion_model_gru_forward(x, params, seq_len=SEQ_LEN)
    y_pred = jax.block_until_ready(y_pred)

    y_ref, _ = _reference_forward(x, params, seq_len=SEQ_LEN)
    assert y_pred.shape == (BATCH, NUM_CLS)
    assert current_batch == BATCH
    assert jnp.allclose(y_pred, y_ref, atol=1e-5, rtol=1e-5)

    print("KERNEL_OK")
</pallas_src>

<mosaic_0001>
module attributes {stable_mosaic.version = 11 : i64} {
  func.func @_gru_fusion_kernel(%arg0: i32, %arg1: memref<16x4xf32, #tpu.memory_space<vmem>>, %arg2: memref<3x4x32xf32, #tpu.memory_space<vmem>>, %arg3: memref<3x32x32xf32, #tpu.memory_space<vmem>>, %arg4: memref<3x1x32xf32, #tpu.memory_space<vmem>>, %arg5: memref<3x1x32xf32, #tpu.memory_space<vmem>>, %arg6: memref<32x16xf32, #tpu.memory_space<vmem>>, %arg7: memref<1x16xf32, #tpu.memory_space<vmem>>, %arg8: memref<16x4xf32, #tpu.memory_space<vmem>>, %arg9: memref<1x4xf32, #tpu.memory_space<vmem>>, %arg10: memref<2x4xf32, #tpu.memory_space<vmem>>) attributes {dimension_semantics = [#tpu.dimension_semantics<arbitrary>], iteration_bounds = array<i64: 1>, scalar_prefetch = 0 : i64, scratch_operands = 0 : i64, tpu.core_type = #tpu.core_type<tc>, window_params = [{pipeline_mode = #tpu.pipeline_mode<synchronous>, transform_indices = @transform_0, window_bounds = array<i64: 16, 4>}, {pipeline_mode = #tpu.pipeline_mode<synchronous>, transform_indices = @transform_1, window_bounds = array<i64: 3, 4, 32>}, {pipeline_mode = #tpu.pipeline_mode<synchronous>, transform_indices = @transform_2, window_bounds = array<i64: 3, 32, 32>}, {pipeline_mode = #tpu.pipeline_mode<synchronous>, transform_indices = @transform_3, window_bounds = array<i64: 3, 1, 32>}, {pipeline_mode = #tpu.pipeline_mode<synchronous>, transform_indices = @transform_4, window_bounds = array<i64: 3, 1, 32>}, {pipeline_mode = #tpu.pipeline_mode<synchronous>, transform_indices = @transform_5, window_bounds = array<i64: 32, 16>}, {pipeline_mode = #tpu.pipeline_mode<synchronous>, transform_indices = @transform_6, window_bounds = array<i64: 1, 16>}, {pipeline_mode = #tpu.pipeline_mode<synchronous>, transform_indices = @transform_7, window_bounds = array<i64: 16, 4>}, {pipeline_mode = #tpu.pipeline_mode<synchronous>, transform_indices = @transform_8, window_bounds = array<i64: 1, 4>}, {pipeline_mode = #tpu.pipeline_mode<synchronous>, transform_indices = @transform_9, window_bounds = array<i64: 2, 4>}]} {
    %c0 = arith.constant 0 : index
    %c0_0 = arith.constant 0 : index
    %0 = vector.load %arg1[%c0, %c0_0] : memref<16x4xf32, #tpu.memory_space<vmem>>, vector<16x4xf32>
    %c0_1 = arith.constant 0 : index
    %c0_2 = arith.constant 0 : index
    %c0_3 = arith.constant 0 : index
    %1 = vector.load %arg2[%c0_1, %c0_2, %c0_3] : memref<3x4x32xf32, #tpu.memory_space<vmem>>, vector<1x4x32xf32>
    %2 = vector.shape_cast %1 : vector<1x4x32xf32> to vector<4x32xf32>
    %cst = arith.constant dense<0.000000e+00> : vector<16x32xf32>
    %3 = tpu.matmul %0, %2, %cst {dimension_numbers = #tpu.dot_dimension_numbers<[1], [0], [0], [1], [0, 0, 1, 1], [], []>} : vector<16x4xf32>, vector<4x32xf32>, vector<16x32xf32> -> vector<16x32xf32>
    %c0_4 = arith.constant 0 : index
    %c0_5 = arith.constant 0 : index
    %c0_6 = arith.constant 0 : index
    %4 = vector.load %arg4[%c0_4, %c0_5, %c0_6] : memref<3x1x32xf32, #tpu.memory_space<vmem>>, vector<1x1x32xf32>
    %5 = vector.shape_cast %4 : vector<1x1x32xf32> to vector<1x32xf32>
    %c0_7 = arith.constant 0 : index
    %c0_8 = arith.constant 0 : index
    %c0_9 = arith.constant 0 : index
    %6 = vector.load %arg5[%c0_7, %c0_8, %c0_9] : memref<3x1x32xf32, #tpu.memory_space<vmem>>, vector<1x1x32xf32>
    %7 = vector.shape_cast %6 : vector<1x1x32xf32> to vector<1x32xf32>
    %8 = arith.addf %5, %7 : vector<1x32xf32>
    %9 = vector.broadcast %8 : vector<1x32xf32> to vector<16x32xf32>
    %10 = arith.addf %3, %9 : vector<16x32xf32>
    %c1 = arith.constant 1 : index
    %c0_10 = arith.constant 0 : index
    %c0_11 = arith.constant 0 : index
    %11 = vector.load %arg2[%c1, %c0_10, %c0_11] : memref<3x4x32xf32, #tpu.memory_space<vmem>>, vector<1x4x32xf32>
    %12 = vector.shape_cast %11 : vector<1x4x32xf32> to vector<4x32xf32>
    %cst_12 = arith.constant dense<0.000000e+00> : vector<16x32xf32>
    %13 = tpu.matmul %0, %12, %cst_12 {dimension_numbers = #tpu.dot_dimension_numbers<[1], [0], [0], [1], [0, 0, 1, 1], [], []>} : vector<16x4xf32>, vector<4x32xf32>, vector<16x32xf32> -> vector<16x32xf32>
    %c1_13 = arith.constant 1 : index
    %c0_14 = arith.constant 0 : index
    %c0_15 = arith.constant 0 : index
    %14 = vector.load %arg4[%c1_13, %c0_14, %c0_15] : memref<3x1x32xf32, #tpu.memory_space<vmem>>, vector<1x1x32xf32>
    %15 = vector.shape_cast %14 : vector<1x1x32xf32> to vector<1x32xf32>
    %c1_16 = arith.constant 1 : index
    %c0_17 = arith.constant 0 : index
    %c0_18 = arith.constant 0 : index
    %16 = vector.load %arg5[%c1_16, %c0_17, %c0_18] : memref<3x1x32xf32, #tpu.memory_space<vmem>>, vector<1x1x32xf32>
    %17 = vector.shape_cast %16 : vector<1x1x32xf32> to vector<1x32xf32>
    %18 = arith.addf %15, %17 : vector<1x32xf32>
    %19 = vector.broadcast %18 : vector<1x32xf32> to vector<16x32xf32>
    %20 = arith.addf %13, %19 : vector<16x32xf32>
    %c2 = arith.constant 2 : index
    %c0_19 = arith.constant 0 : index
    %c0_20 = arith.constant 0 : index
    %21 = vector.load %arg2[%c2, %c0_19, %c0_20] : memref<3x4x32xf32, #tpu.memory_space<vmem>>, vector<1x4x32xf32>
    %22 = vector.shape_cast %21 : vector<1x4x32xf32> to vector<4x32xf32>
    %cst_21 = arith.constant dense<0.000000e+00> : vector<16x32xf32>
    %23 = tpu.matmul %0, %22, %cst_21 {dimension_numbers = #tpu.dot_dimension_numbers<[1], [0], [0], [1], [0, 0, 1, 1], [], []>} : vector<16x4xf32>, vector<4x32xf32>, vector<16x32xf32> -> vector<16x32xf32>
    %c2_22 = arith.constant 2 : index
    %c0_23 = arith.constant 0 : index
    %c0_24 = arith.constant 0 : index
    %24 = vector.load %arg4[%c2_22, %c0_23, %c0_24] : memref<3x1x32xf32, #tpu.memory_space<vmem>>, vector<1x1x32xf32>
    %25 = vector.shape_cast %24 : vector<1x1x32xf32> to vector<1x32xf32>
    %26 = vector.broadcast %25 : vector<1x32xf32> to vector<16x32xf32>
    %27 = arith.addf %23, %26 : vector<16x32xf32>
    %c0_25 = arith.constant 0 : index
    %c0_26 = arith.constant 0 : index
    %c0_27 = arith.constant 0 : index
    %28 = vector.load %arg3[%c0_25, %c0_26, %c0_27] : memref<3x32x32xf32, #tpu.memory_space<vmem>>, vector<1x32x32xf32>
    %29 = vector.shape_cast %28 : vector<1x32x32xf32> to vector<32x32xf32>
    %c1_28 = arith.constant 1 : index
    %c0_29 = arith.constant 0 : index
    %c0_30 = arith.constant 0 : index
    %30 = vector.load %arg3[%c1_28, %c0_29, %c0_30] : memref<3x32x32xf32, #tpu.memory_space<vmem>>, vector<1x32x32xf32>
    %31 = vector.shape_cast %30 : vector<1x32x32xf32> to vector<32x32xf32>
    %c2_31 = arith.constant 2 : index
    %c0_32 = arith.constant 0 : index
    %c0_33 = arith.constant 0 : index
    %32 = vector.load %arg3[%c2_31, %c0_32, %c0_33] : memref<3x32x32xf32, #tpu.memory_space<vmem>>, vector<1x32x32xf32>
    %33 = vector.shape_cast %32 : vector<1x32x32xf32> to vector<32x32xf32>
    %c2_34 = arith.constant 2 : index
    %c0_35 = arith.constant 0 : index
    %c0_36 = arith.constant 0 : index
    %34 = vector.load %arg5[%c2_34, %c0_35, %c0_36] : memref<3x1x32xf32, #tpu.memory_space<vmem>>, vector<1x1x32xf32>
    %35 = vector.shape_cast %34 : vector<1x1x32xf32> to vector<1x32xf32>
    %36 = vector.extract_strided_slice %10 {offsets = [0, 0], sizes = [2, 32], strides = [1, 1]} : vector<16x32xf32> to vector<2x32xf32>
    %37 = arith.negf %36 : vector<2x32xf32>
    %38 = math.exp %37 : vector<2x32xf32>
    %cst_37 = arith.constant 1.000000e+00 : f32
    %39 = vector.broadcast %cst_37 : f32 to vector<2x32xf32>
    %40 = arith.addf %39, %38 : vector<2x32xf32>
    %41 = arith.divf %39, %40 : vector<2x32xf32>
    %42 = vector.extract_strided_slice %20 {offsets = [0, 0], sizes = [2, 32], strides = [1, 1]} : vector<16x32xf32> to vector<2x32xf32>
    %43 = arith.negf %42 : vector<2x32xf32>
    %44 = math.exp %43 : vector<2x32xf32>
    %cst_38 = arith.constant 1.000000e+00 : f32
    %45 = vector.broadcast %cst_38 : f32 to vector<2x32xf32>
    %46 = arith.addf %45, %44 : vector<2x32xf32>
    %47 = arith.divf %45, %46 : vector<2x32xf32>
    %48 = vector.extract_strided_slice %27 {offsets = [0, 0], sizes = [2, 32], strides = [1, 1]} : vector<16x32xf32> to vector<2x32xf32>
    %49 = vector.broadcast %35 : vector<1x32xf32> to vector<2x32xf32>
    %50 = arith.mulf %41, %49 : vector<2x32xf32>
    %51 = arith.addf %48, %50 : vector<2x32xf32>
    %52 = math.tanh %51 : vector<2x32xf32>
    %53 = arith.mulf %47, %52 : vector<2x32xf32>
    %54 = arith.subf %52, %53 : vector<2x32xf32>
    %cst_39 = arith.constant dense<0.000000e+00> : vector<2x32xf32>
    %55 = tpu.matmul %54, %29, %cst_39 {dimension_numbers = #tpu.dot_dimension_numbers<[1], [0], [0], [1], [0, 0, 1, 1], [], []>} : vector<2x32xf32>, vector<32x32xf32>, vector<2x32xf32> -> vector<2x32xf32>
    %cst_40 = arith.constant dense<0.000000e+00> : vector<2x32xf32>
    %56 = tpu.matmul %54, %31, %cst_40 {dimension_numbers = #tpu.dot_dimension_numbers<[1], [0], [0], [1], [0, 0, 1, 1], [], []>} : vector<2x32xf32>, vector<32x32xf32>, vector<2x32xf32> -> vector<2x32xf32>
    %cst_41 = arith.constant dense<0.000000e+00> : vector<2x32xf32>
    %57 = tpu.matmul %54, %33, %cst_41 {dimension_numbers = #tpu.dot_dimension_numbers<[1], [0], [0], [1], [0, 0, 1, 1], [], []>} : vector<2x32xf32>, vector<32x32xf32>, vector<2x32xf32> -> vector<2x32xf32>
    %58 = vector.broadcast %35 : vector<1x32xf32> to vector<2x32xf32>
    %59 = arith.addf %57, %58 : vector<2x32xf32>
    %60 = vector.extract_strided_slice %10 {offsets = [2, 0], sizes = [2, 32], strides = [1, 1]} : vector<16x32xf32> to vector<2x32xf32>
    %61 = arith.addf %60, %55 : vector<2x32xf32>
    %62 = arith.negf %61 : vector<2x32xf32>
    %63 = math.exp %62 : vector<2x32xf32>
    %cst_42 = arith.constant 1.000000e+00 : f32
    %64 = vector.broadcast %cst_42 : f32 to vector<2x32xf32>
    %65 = arith.addf %64, %63 : vector<2x32xf32>
    %66 = arith.divf %64, %65 : vector<2x32xf32>
    %67 = vector.extract_strided_slice %20 {offsets = [2, 0], sizes = [2, 32], strides = [1, 1]} : vector<16x32xf32> to vector<2x32xf32>
    %68 = arith.addf %67, %56 : vector<2x32xf32>
    %69 = arith.negf %68 : vector<2x32xf32>
    %70 = math.exp %69 : vector<2x32xf32>
    %cst_43 = arith.constant 1.000000e+00 : f32
    %71 = vector.broadcast %cst_43 : f32 to vector<2x32xf32>
    %72 = arith.addf %71, %70 : vector<2x32xf32>
    %73 = arith.divf %71, %72 : vector<2x32xf32>
    %74 = vector.extract_strided_slice %27 {offsets = [2, 0], sizes = [2, 32], strides = [1, 1]} : vector<16x32xf32> to vector<2x32xf32>
    %75 = arith.mulf %66, %59 : vector<2x32xf32>
    %76 = arith.addf %74, %75 : vector<2x32xf32>
    %77 = math.tanh %76 : vector<2x32xf32>
    %78 = arith.subf %54, %77 : vector<2x32xf32>
    %79 = arith.mulf %73, %78 : vector<2x32xf32>
    %80 = arith.addf %77, %79 : vector<2x32xf32>
    %cst_44 = arith.constant dense<0.000000e+00> : vector<2x32xf32>
    %81 = tpu.matmul %80, %29, %cst_44 {dimension_numbers = #tpu.dot_dimension_numbers<[1], [0], [0], [1], [0, 0, 1, 1], [], []>} : vector<2x32xf32>, vector<32x32xf32>, vector<2x32xf32> -> vector<2x32xf32>
    %cst_45 = arith.constant dense<0.000000e+00> : vector<2x32xf32>
    %82 = tpu.matmul %80, %31, %cst_45 {dimension_numbers = #tpu.dot_dimension_numbers<[1], [0], [0], [1], [0, 0, 1, 1], [], []>} : vector<2x32xf32>, vector<32x32xf32>, vector<2x32xf32> -> vector<2x32xf32>
    %cst_46 = arith.constant dense<0.000000e+00> : vector<2x32xf32>
    %83 = tpu.matmul %80, %33, %cst_46 {dimension_numbers = #tpu.dot_dimension_numbers<[1], [0], [0], [1], [0, 0, 1, 1], [], []>} : vector<2x32xf32>, vector<32x32xf32>, vector<2x32xf32> -> vector<2x32xf32>
    %84 = vector.broadcast %35 : vector<1x32xf32> to vector<2x32xf32>
    %85 = arith.addf %83, %84 : vector<2x32xf32>
    %86 = vector.extract_strided_slice %10 {offsets = [4, 0], sizes = [2, 32], strides = [1, 1]} : vector<16x32xf32> to vector<2x32xf32>
    %87 = arith.addf %86, %81 : vector<2x32xf32>
    %88 = arith.negf %87 : vector<2x32xf32>
    %89 = math.exp %88 : vector<2x32xf32>
    %cst_47 = arith.constant 1.000000e+00 : f32
    %90 = vector.broadcast %cst_47 : f32 to vector<2x32xf32>
    %91 = arith.addf %90, %89 : vector<2x32xf32>
    %92 = arith.divf %90, %91 : vector<2x32xf32>
    %93 = vector.extract_strided_slice %20 {offsets = [4, 0], sizes = [2, 32], strides = [1, 1]} : vector<16x32xf32> to vector<2x32xf32>
    %94 = arith.addf %93, %82 : vector<2x32xf32>
    %95 = arith.negf %94 : vector<2x32xf32>
    %96 = math.exp %95 : vector<2x32xf32>
    %cst_48 = arith.constant 1.000000e+00 : f32
    %97 = vector.broadcast %cst_48 : f32 to vector<2x32xf32>
    %98 = arith.addf %97, %96 : vector<2x32xf32>
    %99 = arith.divf %97, %98 : vector<2x32xf32>
    %100 = vector.extract_strided_slice %27 {offsets = [4, 0], sizes = [2, 32], strides = [1, 1]} : vector<16x32xf32> to vector<2x32xf32>
    %101 = arith.mulf %92, %85 : vector<2x32xf32>
    %102 = arith.addf %100, %101 : vector<2x32xf32>
    %103 = math.tanh %102 : vector<2x32xf32>
    %104 = arith.subf %80, %103 : vector<2x32xf32>
    %105 = arith.mulf %99, %104 : vector<2x32xf32>
    %106 = arith.addf %103, %105 : vector<2x32xf32>
    %cst_49 = arith.constant dense<0.000000e+00> : vector<2x32xf32>
    %107 = tpu.matmul %106, %29, %cst_49 {dimension_numbers = #tpu.dot_dimension_numbers<[1], [0], [0], [1], [0, 0, 1, 1], [], []>} : vector<2x32xf32>, vector<32x32xf32>, vector<2x32xf32> -> vector<2x32xf32>
    %cst_50 = arith.constant dense<0.000000e+00> : vector<2x32xf32>
    %108 = tpu.matmul %106, %31, %cst_50 {dimension_numbers = #tpu.dot_dimension_numbers<[1], [0], [0], [1], [0, 0, 1, 1], [], []>} : vector<2x32xf32>, vector<32x32xf32>, vector<2x32xf32> -> vector<2x32xf32>
    %cst_51 = arith.constant dense<0.000000e+00> : vector<2x32xf32>
    %109 = tpu.matmul %106, %33, %cst_51 {dimension_numbers = #tpu.dot_dimension_numbers<[1], [0], [0], [1], [0, 0, 1, 1], [], []>} : vector<2x32xf32>, vector<32x32xf32>, vector<2x32xf32> -> vector<2x32xf32>
    %110 = vector.broadcast %35 : vector<1x32xf32> to vector<2x32xf32>
    %111 = arith.addf %109, %110 : vector<2x32xf32>
    %112 = vector.extract_strided_slice %10 {offsets = [6, 0], sizes = [2, 32], strides = [1, 1]} : vector<16x32xf32> to vector<2x32xf32>
    %113 = arith.addf %112, %107 : vector<2x32xf32>
    %114 = arith.negf %113 : vector<2x32xf32>
    %115 = math.exp %114 : vector<2x32xf32>
    %cst_52 = arith.constant 1.000000e+00 : f32
    %116 = vector.broadcast %cst_52 : f32 to vector<2x32xf32>
    %117 = arith.addf %116, %115 : vector<2x32xf32>
    %118 = arith.divf %116, %117 : vector<2x32xf32>
    %119 = vector.extract_strided_slice %20 {offsets = [6, 0], sizes = [2, 32], strides = [1, 1]} : vector<16x32xf32> to vector<2x32xf32>
    %120 = arith.addf %119, %108 : vector<2x32xf32>
    %121 = arith.negf %120 : vector<2x32xf32>
    %122 = math.exp %121 : vector<2x32xf32>
    %cst_53 = arith.constant 1.000000e+00 : f32
    %123 = vector.broadcast %cst_53 : f32 to vector<2x32xf32>
    %124 = arith.addf %123, %122 : vector<2x32xf32>
    %125 = arith.divf %123, %124 : vector<2x32xf32>
    %126 = vector.extract_strided_slice %27 {offsets = [6, 0], sizes = [2, 32], strides = [1, 1]} : vector<16x32xf32> to vector<2x32xf32>
    %127 = arith.mulf %118, %111 : vector<2x32xf32>
    %128 = arith.addf %126, %127 : vector<2x32xf32>
    %129 = math.tanh %128 : vector<2x32xf32>
    %130 = arith.subf %106, %129 : vector<2x32xf32>
    %131 = arith.mulf %125, %130 : vector<2x32xf32>
    %132 = arith.addf %129, %131 : vector<2x32xf32>
    %cst_54 = arith.constant dense<0.000000e+00> : vector<2x32xf32>
    %133 = tpu.matmul %132, %29, %cst_54 {dimension_numbers = #tpu.dot_dimension_numbers<[1], [0], [0], [1], [0, 0, 1, 1], [], []>} : vector<2x32xf32>, vector<32x32xf32>, vector<2x32xf32> -> vector<2x32xf32>
    %cst_55 = arith.constant dense<0.000000e+00> : vector<2x32xf32>
    %134 = tpu.matmul %132, %31, %cst_55 {dimension_numbers = #tpu.dot_dimension_numbers<[1], [0], [0], [1], [0, 0, 1, 1], [], []>} : vector<2x32xf32>, vector<32x32xf32>, vector<2x32xf32> -> vector<2x32xf32>
    %cst_56 = arith.constant dense<0.000000e+00> : vector<2x32xf32>
    %135 = tpu.matmul %132, %33, %cst_56 {dimension_numbers = #tpu.dot_dimension_numbers<[1], [0], [0], [1], [0, 0, 1, 1], [], []>} : vector<2x32xf32>, vector<32x32xf32>, vector<2x32xf32> -> vector<2x32xf32>
    %136 = vector.broadcast %35 : vector<1x32xf32> to vector<2x32xf32>
    %137 = arith.addf %135, %136 : vector<2x32xf32>
    %138 = vector.extract_strided_slice %10 {offsets = [8, 0], sizes = [2, 32], strides = [1, 1]} : vector<16x32xf32> to vector<2x32xf32>
    %139 = arith.addf %138, %133 : vector<2x32xf32>
    %140 = arith.negf %139 : vector<2x32xf32>
    %141 = math.exp %140 : vector<2x32xf32>
    %cst_57 = arith.constant 1.000000e+00 : f32
    %142 = vector.broadcast %cst_57 : f32 to vector<2x32xf32>
    %143 = arith.addf %142, %141 : vector<2x32xf32>
    %144 = arith.divf %142, %143 : vector<2x32xf32>
    %145 = vector.extract_strided_slice %20 {offsets = [8, 0], sizes = [2, 32], strides = [1, 1]} : vector<16x32xf32> to vector<2x32xf32>
    %146 = arith.addf %145, %134 : vector<2x32xf32>
    %147 = arith.negf %146 : vector<2x32xf32>
    %148 = math.exp %147 : vector<2x32xf32>
    %cst_58 = arith.constant 1.000000e+00 : f32
    %149 = vector.broadcast %cst_58 : f32 to vector<2x32xf32>
    %150 = arith.addf %149, %148 : vector<2x32xf32>
    %151 = arith.divf %149, %150 : vector<2x32xf32>
    %152 = vector.extract_strided_slice %27 {offsets = [8, 0], sizes = [2, 32], strides = [1, 1]} : vector<16x32xf32> to vector<2x32xf32>
    %153 = arith.mulf %144, %137 : vector<2x32xf32>
    %154 = arith.addf %152, %153 : vector<2x32xf32>
    %155 = math.tanh %154 : vector<2x32xf32>
    %156 = arith.subf %132, %155 : vector<2x32xf32>
    %157 = arith.mulf %151, %156 : vector<2x32xf32>
    %158 = arith.addf %155, %157 : vector<2x32xf32>
    %cst_59 = arith.constant dense<0.000000e+00> : vector<2x32xf32>
    %159 = tpu.matmul %158, %29, %cst_59 {dimension_numbers = #tpu.dot_dimension_numbers<[1], [0], [0], [1], [0, 0, 1, 1], [], []>} : vector<2x32xf32>, vector<32x32xf32>, vector<2x32xf32> -> vector<2x32xf32>
    %cst_60 = arith.constant dense<0.000000e+00> : vector<2x32xf32>
    %160 = tpu.matmul %158, %31, %cst_60 {dimension_numbers = #tpu.dot_dimension_numbers<[1], [0], [0], [1], [0, 0, 1, 1], [], []>} : vector<2x32xf32>, vector<32x32xf32>, vector<2x32xf32> -> vector<2x32xf32>
    %cst_61 = arith.constant dense<0.000000e+00> : vector<2x32xf32>
    %161 = tpu.matmul %158, %33, %cst_61 {dimension_numbers = #tpu.dot_dimension_numbers<[1], [0], [0], [1], [0, 0, 1, 1], [], []>} : vector<2x32xf32>, vector<32x32xf32>, vector<2x32xf32> -> vector<2x32xf32>
    %162 = vector.broadcast %35 : vector<1x32xf32> to vector<2x32xf32>
    %163 = arith.addf %161, %162 : vector<2x32xf32>
    %164 = vector.extract_strided_slice %10 {offsets = [10, 0], sizes = [2, 32], strides = [1, 1]} : vector<16x32xf32> to vector<2x32xf32>
    %165 = arith.addf %164, %159 : vector<2x32xf32>
    %166 = arith.negf %165 : vector<2x32xf32>
    %167 = math.exp %166 : vector<2x32xf32>
    %cst_62 = arith.constant 1.000000e+00 : f32
    %168 = vector.broadcast %cst_62 : f32 to vector<2x32xf32>
    %169 = arith.addf %168, %167 : vector<2x32xf32>
    %170 = arith.divf %168, %169 : vector<2x32xf32>
    %171 = vector.extract_strided_slice %20 {offsets = [10, 0], sizes = [2, 32], strides = [1, 1]} : vector<16x32xf32> to vector<2x32xf32>
    %172 = arith.addf %171, %160 : vector<2x32xf32>
    %173 = arith.negf %172 : vector<2x32xf32>
    %174 = math.exp %173 : vector<2x32xf32>
    %cst_63 = arith.constant 1.000000e+00 : f32
    %175 = vector.broadcast %cst_63 : f32 to vector<2x32xf32>
    %176 = arith.addf %175, %174 : vector<2x32xf32>
    %177 = arith.divf %175, %176 : vector<2x32xf32>
    %178 = vector.extract_strided_slice %27 {offsets = [10, 0], sizes = [2, 32], strides = [1, 1]} : vector<16x32xf32> to vector<2x32xf32>
    %179 = arith.mulf %170, %163 : vector<2x32xf32>
    %180 = arith.addf %178, %179 : vector<2x32xf32>
    %181 = math.tanh %180 : vector<2x32xf32>
    %182 = arith.subf %158, %181 : vector<2x32xf32>
    %183 = arith.mulf %177, %182 : vector<2x32xf32>
    %184 = arith.addf %181, %183 : vector<2x32xf32>
    %cst_64 = arith.constant dense<0.000000e+00> : vector<2x32xf32>
    %185 = tpu.matmul %184, %29, %cst_64 {dimension_numbers = #tpu.dot_dimension_numbers<[1], [0], [0], [1], [0, 0, 1, 1], [], []>} : vector<2x32xf32>, vector<32x32xf32>, vector<2x32xf32> -> vector<2x32xf32>
    %cst_65 = arith.constant dense<0.000000e+00> : vector<2x32xf32>
    %186 = tpu.matmul %184, %31, %cst_65 {dimension_numbers = #tpu.dot_dimension_numbers<[1], [0], [0], [1], [0, 0, 1, 1], [], []>} : vector<2x32xf32>, vector<32x32xf32>, vector<2x32xf32> -> vector<2x32xf32>
    %cst_66 = arith.constant dense<0.000000e+00> : vector<2x32xf32>
    %187 = tpu.matmul %184, %33, %cst_66 {dimension_numbers = #tpu.dot_dimension_numbers<[1], [0], [0], [1], [0, 0, 1, 1], [], []>} : vector<2x32xf32>, vector<32x32xf32>, vector<2x32xf32> -> vector<2x32xf32>
    %188 = vector.broadcast %35 : vector<1x32xf32> to vector<2x32xf32>
    %189 = arith.addf %187, %188 : vector<2x32xf32>
    %190 = vector.extract_strided_slice %10 {offsets = [12, 0], sizes = [2, 32], strides = [1, 1]} : vector<16x32xf32> to vector<2x32xf32>
    %191 = arith.addf %190, %185 : vector<2x32xf32>
    %192 = arith.negf %191 : vector<2x32xf32>
    %193 = math.exp %192 : vector<2x32xf32>
    %cst_67 = arith.constant 1.000000e+00 : f32
    %194 = vector.broadcast %cst_67 : f32 to vector<2x32xf32>
    %195 = arith.addf %194, %193 : vector<2x32xf32>
    %196 = arith.divf %194, %195 : vector<2x32xf32>
    %197 = vector.extract_strided_slice %20 {offsets = [12, 0], sizes = [2, 32], strides = [1, 1]} : vector<16x32xf32> to vector<2x32xf32>
    %198 = arith.addf %197, %186 : vector<2x32xf32>
    %199 = arith.negf %198 : vector<2x32xf32>
    %200 = math.exp %199 : vector<2x32xf32>
    %cst_68 = arith.constant 1.000000e+00 : f32
    %201 = vector.broadcast %cst_68 : f32 to vector<2x32xf32>
    %202 = arith.addf %201, %200 : vector<2x32xf32>
    %203 = arith.divf %201, %202 : vector<2x32xf32>
    %204 = vector.extract_strided_slice %27 {offsets = [12, 0], sizes = [2, 32], strides = [1, 1]} : vector<16x32xf32> to vector<2x32xf32>
    %205 = arith.mulf %196, %189 : vector<2x32xf32>
    %206 = arith.addf %204, %205 : vector<2x32xf32>
    %207 = math.tanh %206 : vector<2x32xf32>
    %208 = arith.subf %184, %207 : vector<2x32xf32>
    %209 = arith.mulf %203, %208 : vector<2x32xf32>
    %210 = arith.addf %207, %209 : vector<2x32xf32>
    %cst_69 = arith.constant dense<0.000000e+00> : vector<2x32xf32>
    %211 = tpu.matmul %210, %29, %cst_69 {dimension_numbers = #tpu.dot_dimension_numbers<[1], [0], [0], [1], [0, 0, 1, 1], [], []>} : vector<2x32xf32>, vector<32x32xf32>, vector<2x32xf32> -> vector<2x32xf32>
    %cst_70 = arith.constant dense<0.000000e+00> : vector<2x32xf32>
    %212 = tpu.matmul %210, %31, %cst_70 {dimension_numbers = #tpu.dot_dimension_numbers<[1], [0], [0], [1], [0, 0, 1, 1], [], []>} : vector<2x32xf32>, vector<32x32xf32>, vector<2x32xf32> -> vector<2x32xf32>
    %cst_71 = arith.constant dense<0.000000e+00> : vector<2x32xf32>
    %213 = tpu.matmul %210, %33, %cst_71 {dimension_numbers = #tpu.dot_dimension_numbers<[1], [0], [0], [1], [0, 0, 1, 1], [], []>} : vector<2x32xf32>, vector<32x32xf32>, vector<2x32xf32> -> vector<2x32xf32>
    %214 = vector.broadcast %35 : vector<1x32xf32> to vector<2x32xf32>
    %215 = arith.addf %213, %214 : vector<2x32xf32>
    %216 = vector.extract_strided_slice %10 {offsets = [14, 0], sizes = [2, 32], strides = [1, 1]} : vector<16x32xf32> to vector<2x32xf32>
    %217 = arith.addf %216, %211 : vector<2x32xf32>
    %218 = arith.negf %217 : vector<2x32xf32>
    %219 = math.exp %218 : vector<2x32xf32>
    %cst_72 = arith.constant 1.000000e+00 : f32
    %220 = vector.broadcast %cst_72 : f32 to vector<2x32xf32>
    %221 = arith.addf %220, %219 : vector<2x32xf32>
    %222 = arith.divf %220, %221 : vector<2x32xf32>
    %223 = vector.extract_strided_slice %20 {offsets = [14, 0], sizes = [2, 32], strides = [1, 1]} : vector<16x32xf32> to vector<2x32xf32>
    %224 = arith.addf %223, %212 : vector<2x32xf32>
    %225 = arith.negf %224 : vector<2x32xf32>
    %226 = math.exp %225 : vector<2x32xf32>
    %cst_73 = arith.constant 1.000000e+00 : f32
    %227 = vector.broadcast %cst_73 : f32 to vector<2x32xf32>
    %228 = arith.addf %227, %226 : vector<2x32xf32>
    %229 = arith.divf %227, %228 : vector<2x32xf32>
    %230 = vector.extract_strided_slice %27 {offsets = [14, 0], sizes = [2, 32], strides = [1, 1]} : vector<16x32xf32> to vector<2x32xf32>
    %231 = arith.mulf %222, %215 : vector<2x32xf32>
    %232 = arith.addf %230, %231 : vector<2x32xf32>
    %233 = math.tanh %232 : vector<2x32xf32>
    %234 = arith.subf %210, %233 : vector<2x32xf32>
    %235 = arith.mulf %229, %234 : vector<2x32xf32>
    %236 = arith.addf %233, %235 : vector<2x32xf32>
    %c0_74 = arith.constant 0 : index
    %c0_75 = arith.constant 0 : index
    %237 = vector.load %arg6[%c0_74, %c0_75] : memref<32x16xf32, #tpu.memory_space<vmem>>, vector<32x16xf32>
    %cst_76 = arith.constant dense<0.000000e+00> : vector<2x16xf32>
    %238 = tpu.matmul %236, %237, %cst_76 {dimension_numbers = #tpu.dot_dimension_numbers<[1], [0], [0], [1], [0, 0, 1, 1], [], []>} : vector<2x32xf32>, vector<32x16xf32>, vector<2x16xf32> -> vector<2x16xf32>
    %c0_77 = arith.constant 0 : index
    %c0_78 = arith.constant 0 : index
    %239 = vector.load %arg7[%c0_77, %c0_78] : memref<1x16xf32, #tpu.memory_space<vmem>>, vector<1x16xf32>
    %240 = vector.broadcast %239 : vector<1x16xf32> to vector<2x16xf32>
    %241 = arith.addf %238, %240 : vector<2x16xf32>
    %cst_79 = arith.constant 0.000000e+00 : f32
    %242 = vector.broadcast %cst_79 : f32 to vector<2x16xf32>
    %243 = arith.maximumf %241, %242 : vector<2x16xf32>
    %c0_80 = arith.constant 0 : index
    %c0_81 = arith.constant 0 : index
    %244 = vector.load %arg8[%c0_80, %c0_81] : memref<16x4xf32, #tpu.memory_space<vmem>>, vector<16x4xf32>
    %cst_82 = arith.constant dense<0.000000e+00> : vector<2x4xf32>
    %245 = tpu.matmul %243, %244, %cst_82 {dimension_numbers = #tpu.dot_dimension_numbers<[1], [0], [0], [1], [0, 0, 1, 1], [], []>} : vector<2x16xf32>, vector<16x4xf32>, vector<2x4xf32> -> vector<2x4xf32>
    %c0_83 = arith.constant 0 : index
    %c0_84 = arith.constant 0 : index
    %246 = vector.load %arg9[%c0_83, %c0_84] : memref<1x4xf32, #tpu.memory_space<vmem>>, vector<1x4xf32>
    %247 = vector.broadcast %246 : vector<1x4xf32> to vector<2x4xf32>
    %248 = arith.addf %245, %247 : vector<2x4xf32>
    %cst_85 = arith.constant dense<0xFF800000> : vector<2xf32>
    %249 = vector.multi_reduction <maximumf>, %248, %cst_85 [1] : vector<2x4xf32> to vector<2xf32>
    %250 = vector.shape_cast %249 : vector<2xf32> to vector<2x1xf32>
    %251 = vector.broadcast %250 : vector<2x1xf32> to vector<2x4xf32>
    %252 = arith.subf %248, %251 : vector<2x4xf32>
    %253 = math.exp %252 : vector<2x4xf32>
    %cst_86 = arith.constant dense<0.000000e+00> : vector<2xf32>
    %254 = vector.multi_reduction <add>, %253, %cst_86 [1] : vector<2x4xf32> to vector<2xf32>
    %255 = vector.shape_cast %254 : vector<2xf32> to vector<2x1xf32>
    %256 = math.log %255 : vector<2x1xf32>
    %257 = arith.addf %256, %250 : vector<2x1xf32>
    %258 = vector.broadcast %257 : vector<2x1xf32> to vector<2x4xf32>
    %259 = arith.subf %248, %258 : vector<2x4xf32>
    %c0_87 = arith.constant 0 : index
    %c0_88 = arith.constant 0 : index
    %260 = vector.load %arg10[%c0_87, %c0_88] : memref<2x4xf32, #tpu.memory_space<vmem>>, vector<2x4xf32>
    tpu.vector_store %arg10[%c0_87, %c0_88], %259 {strides = array<i32>} : memref<2x4xf32, #tpu.memory_space<vmem>>, vector<2x4xf32>,
    return
  }
  func.func @transform_0(%arg0: i32) -> (i32, i32) {
    %c0_i32 = arith.constant 0 : i32
    %c0_i32_0 = arith.constant 0 : i32
    %c0_i32_1 = arith.constant 0 : i32
    return %c0_i32, %c0_i32_0 : i32, i32
  }
  func.func @transform_1(%arg0: i32) -> (i32, i32, i32) {
    %c0_i32 = arith.constant 0 : i32
    %c0_i32_0 = arith.constant 0 : i32
    %c0_i32_1 = arith.constant 0 : i32
    %c0_i32_2 = arith.constant 0 : i32
    return %c0_i32, %c0_i32_0, %c0_i32_1 : i32, i32, i32
  }
  func.func @transform_2(%arg0: i32) -> (i32, i32, i32) {
    %c0_i32 = arith.constant 0 : i32
    %c0_i32_0 = arith.constant 0 : i32
    %c0_i32_1 = arith.constant 0 : i32
    %c0_i32_2 = arith.constant 0 : i32
    return %c0_i32, %c0_i32_0, %c0_i32_1 : i32, i32, i32
  }
  func.func @transform_3(%arg0: i32) -> (i32, i32, i32) {
    %c0_i32 = arith.constant 0 : i32
    %c0_i32_0 = arith.constant 0 : i32
    %c0_i32_1 = arith.constant 0 : i32
    %c0_i32_2 = arith.constant 0 : i32
    return %c0_i32, %c0_i32_0, %c0_i32_1 : i32, i32, i32
  }
  func.func @transform_4(%arg0: i32) -> (i32, i32, i32) {
    %c0_i32 = arith.constant 0 : i32
    %c0_i32_0 = arith.constant 0 : i32
    %c0_i32_1 = arith.constant 0 : i32
    %c0_i32_2 = arith.constant 0 : i32
    return %c0_i32, %c0_i32_0, %c0_i32_1 : i32, i32, i32
  }
  func.func @transform_5(%arg0: i32) -> (i32, i32) {
    %c0_i32 = arith.constant 0 : i32
    %c0_i32_0 = arith.constant 0 : i32
    %c0_i32_1 = arith.constant 0 : i32
    return %c0_i32, %c0_i32_0 : i32, i32
  }
  func.func @transform_6(%arg0: i32) -> (i32, i32) {
    %c0_i32 = arith.constant 0 : i32
    %c0_i32_0 = arith.constant 0 : i32
    %c0_i32_1 = arith.constant 0 : i32
    return %c0_i32, %c0_i32_0 : i32, i32
  }
  func.func @transform_7(%arg0: i32) -> (i32, i32) {
    %c0_i32 = arith.constant 0 : i32
    %c0_i32_0 = arith.constant 0 : i32
    %c0_i32_1 = arith.constant 0 : i32
    return %c0_i32, %c0_i32_0 : i32, i32
  }
  func.func @transform_8(%arg0: i32) -> (i32, i32) {
    %c0_i32 = arith.constant 0 : i32
    %c0_i32_0 = arith.constant 0 : i32
    %c0_i32_1 = arith.constant 0 : i32
    return %c0_i32, %c0_i32_0 : i32, i32
  }
  func.func @transform_9(%arg0: i32) -> (i32, i32) {
    %c0_i32 = arith.constant 0 : i32
    %c0_i32_0 = arith.constant 0 : i32
    %c0_i32_1 = arith.constant 0 : i32
    return %c0_i32, %c0_i32_0 : i32, i32
  }
}

</mosaic_0001>

<llo_original>
// kernel: tpu_custom_call.1
$region0: #{tpu_custom_call.1}
  #allocation0 [shape = 'u32[]', space=smem, size = 0x4, offset = 0x4, fixed_abs, tag = 'smem constant byte address 0x4 - core index']
  #allocation1 [shape = 'u32[144,128]{1,0:T(1,128)}', space=vmem, size = 0x12000, scoped, tag = 'internal scratch']
  %s0 = inlined_call_operand.vmem [shape: f32[16,4], index: 0, kind: input, shape index: {}]
  %s1 = inlined_call_operand.vmem [shape: f32[3,4,32], index: 1, kind: input, shape index: {}]
  %s2 = inlined_call_operand.hbm [shape: f32[3,32,32], index: 2, kind: input, shape index: {}]
  %s3 = inlined_call_operand.vmem [shape: f32[3,1,32], index: 3, kind: input, shape index: {}]
  %s4 = inlined_call_operand.vmem [shape: f32[3,1,32], index: 4, kind: input, shape index: {}]
  %s5 = inlined_call_operand.vmem [shape: f32[32,16], index: 5, kind: input, shape index: {}]
  %s6 = inlined_call_operand.vmem [shape: f32[1,16], index: 6, kind: input, shape index: {}]
  %s7 = inlined_call_operand.vmem [shape: f32[16,4], index: 7, kind: input, shape index: {}]
  %s8 = inlined_call_operand.vmem [shape: f32[1,4], index: 8, kind: input, shape index: {}]
  %s9 = inlined_call_operand.hbm [shape: f32[2,4], index: 9, kind: output, shape index: {}]
  %s10 = sld [smem:[#allocation0]]
  $region50: #{tpu_custom_call.1} parent=0
    _
  %s12 = ssub.s32 1, %s10
  %s13 = scalar_select 0, %s12, %s10
  $region1: #{tpu_custom_call.1} parent=0
    #allocation2 [shape = 'u8[49152]{0}', space=vmem, size = 0xc000, scoped, tag = 'input window, operand 2, single buffered']
    #allocation3 [shape = 's32[1]{0}', space=sflag, size = 0x4, scoped, tag = 'scoped memory for tpu_custom_call.1']
    #allocation4 [shape = 's32[1]{0}', space=sflag, size = 0x4, scoped, tag = 'scoped memory for tpu_custom_call.1']
    #allocation5 [shape = 'u8[1024]{0}', space=vmem, size = 0x400, scoped, tag = 'output window, operand 0, single buffered']
    %14 = vsyncpa [#allocation3], 0
    %15 = vsyncpa [#allocation4], 0
    // Predicated region
    $region2: #{tpu_custom_call.1} parent=1 // pred_check
      _
    $region3: #{tpu_custom_call.1} parent=1 // pred_check_branch
      %17 = sbr.rel (0) target = $region5
    $region4: #{tpu_custom_call.1} parent=1 // pred_region
      _
    $region5: #{tpu_custom_call.1} parent=1 // pred_fallthru
      _
    // Predicated region
    $region6: #{tpu_custom_call.1} parent=1 // pred_check
      _
    $region7: #{tpu_custom_call.1} parent=1 // pred_check_branch
      %19 = sbr.rel (0) target = $region9
    $region8: #{tpu_custom_call.1} parent=1 // pred_region
      _
    $region9: #{tpu_custom_call.1} parent=1 // pred_fallthru
      _
    // Predicated region
    $region10: #{tpu_custom_call.1} parent=1 // pred_check
      _
    $region11: #{tpu_custom_call.1} parent=1 // pred_check_branch
      %21 = sbr.rel (0) target = $region13
    $region12: #{tpu_custom_call.1} parent=1 // pred_region
      %s23 = ssub.s32 1536, 1536
      %24 = vsyncadd [#allocation3], %s23
      %s25 = sshll.u32 [#allocation2], 4
      %s26 = int_to_ptr.vmem [resolvable:$true] %s25
      %31 = dma.hbm_to_vmem [thread:$0]  %s2, 1536, %s26, [#allocation3], 128, 128, 8
    $region13: #{tpu_custom_call.1} parent=1 // pred_fallthru
      _
    // Predicated region
    $region14: #{tpu_custom_call.1} parent=1 // pred_check
      _
    $region15: #{tpu_custom_call.1} parent=1 // pred_check_branch
      %33 = sbr.rel (0) target = $region17
    $region16: #{tpu_custom_call.1} parent=1 // pred_region
      _
    $region17: #{tpu_custom_call.1} parent=1 // pred_fallthru
      _
    // Predicated region
    $region18: #{tpu_custom_call.1} parent=1 // pred_check
      _
    $region19: #{tpu_custom_call.1} parent=1 // pred_check_branch
      %35 = sbr.rel (0) target = $region21
    $region20: #{tpu_custom_call.1} parent=1 // pred_region
      _
    $region21: #{tpu_custom_call.1} parent=1 // pred_fallthru
      _
    // Predicated region
    $region22: #{tpu_custom_call.1} parent=1 // pred_check
      _
    $region23: #{tpu_custom_call.1} parent=1 // pred_check_branch
      %37 = sbr.rel (0) target = $region25
    $region24: #{tpu_custom_call.1} parent=1 // pred_region
      _
    $region25: #{tpu_custom_call.1} parent=1 // pred_fallthru
      _
    // Predicated region
    $region26: #{tpu_custom_call.1} parent=1 // pred_check
      _
    $region27: #{tpu_custom_call.1} parent=1 // pred_check_branch
      %39 = sbr.rel (0) target = $region29
    $region28: #{tpu_custom_call.1} parent=1 // pred_region
      _
    $region29: #{tpu_custom_call.1} parent=1 // pred_fallthru
      _
    // Predicated region
    $region30: #{tpu_custom_call.1} parent=1 // pred_check
      _
    $region31: #{tpu_custom_call.1} parent=1 // pred_check_branch
      %41 = sbr.rel (0) target = $region33
    $region32: #{tpu_custom_call.1} parent=1 // pred_region
      _
    $region33: #{tpu_custom_call.1} parent=1 // pred_fallthru
      _
    // Predicated region
    $region34: #{tpu_custom_call.1} parent=1 // pred_check
      _
    $region35: #{tpu_custom_call.1} parent=1 // pred_check_branch
      %43 = sbr.rel (0) target = $region37
    $region36: #{tpu_custom_call.1} parent=1 // pred_region
      _
    $region37: #{tpu_custom_call.1} parent=1 // pred_fallthru
      _
    // Predicated region
    $region38: #{tpu_custom_call.1} parent=1 // pred_check
      _
    $region39: #{tpu_custom_call.1} parent=1 // pred_check_branch
      %45 = sbr.rel (0) target = $region41
    $region40: #{tpu_custom_call.1} parent=1 // pred_region
      %46 = dma.done [#allocation3], 1536
    $region41: #{tpu_custom_call.1} parent=1 // pred_fallthru
      _
    %v47 = vld [vmem:[%s0] sm:$0xff]
    %v48 = vld [vmem:[%s0 + $0x8] sm:$0xff]
    %v49 = vld [vmem:[%s1] sm:$0xf]
    %v50 = vld [vmem:[%s3] sm:$0x1]
    %v51 = vld [vmem:[%s4] sm:$0x1]
    %v52 = vadd.f32 %v50, %v51
    %v54 = vlaneseq
    %v55 = vshrl.u32 %v54, 7
    %v56 = vsub.s32 0, %v55
    %v57 = vrot.slane %v52, %v56
    %vm59 = vcmask 31744
    %v61 = vsel %vm59, %v47, 0
    %v64 = vsel %vm59, %v48, 0
    %vm66 = vcmask 1043456
    %v68 = vsel %vm66, %v49, 0
    %70 = vmatprep.subr.mxu0 0.0
    %71 = vmatpush1.msra.mxu0 0.0
    %72 = vmatprep.subr.mxu0 0.0
    %73 = vmatpush1.msra.mxu0 0.0
    %74 = vmatprep.subr.mxu0 0.0
    %75 = vmatpush1.msra.mxu0 0.0
    %76 = vmatprep.subr.mxu0 0.0
    %77 = vmatpush1.msra.mxu0 0.0
    %78 = vmatprep.subr.mxu0 0.0
    %79 = vmatpush1.msra.mxu0 0.0
    %80 = vmatprep.subr.mxu0 0.0
    %81 = vmatpush1.msra.mxu0 0.0
    %82 = vmatprep.subr.mxu0 0.0
    %83 = vmatpush1.msra.mxu0 0.0
    %84 = vmatprep.subr.mxu0 0.0
    %85 = vmatpush1.msra.mxu0 0.0
    %86 = vmatprep.subr.mxu0 0.0
    %87 = vmatpush1.msra.mxu0 0.0
    %88 = vmatprep.subr.mxu0 0.0
    %89 = vmatpush1.msra.mxu0 0.0
    %90 = vmatprep.subr.mxu0 0.0
    %91 = vmatpush1.msra.mxu0 0.0
    %92 = vmatprep.subr.mxu0 0.0
    %93 = vmatpush1.msra.mxu0 0.0
    %94 = vmatprep.subr.mxu0 0.0
    %95 = vmatpush1.msra.mxu0 0.0
    %96 = vmatprep.subr.mxu0 0.0
    %97 = vmatpush1.msra.mxu0 0.0
    %98 = vmatprep.subr.mxu0 0.0
    %99 = vmatpush1.msra.mxu0 0.0
    %100 = vmatprep.subr.mxu0 0.0
    %101 = vmatpush1.msra.mxu0 %v68
    %102 = vmatprep.subr.mxu0 0.0
    %103 = vmatpush2.msra.mxu0 0.0
    %104 = vmatprep.subr.mxu0 0.0
    %105 = vmatpush2.msra.mxu0 0.0
    %106 = vmatprep.subr.mxu0 0.0
    %107 = vmatpush2.msra.mxu0 0.0
    %108 = vmatprep.subr.mxu0 0.0
    %109 = vmatpush2.msra.mxu0 0.0
    %110 = vmatprep.subr.mxu0 0.0
    %111 = vmatpush2.msra.mxu0 0.0
    %112 = vmatprep.subr.mxu0 0.0
    %113 = vmatpush2.msra.mxu0 0.0
    %114 = vmatprep.subr.mxu0 0.0
    %115 = vmatpush2.msra.mxu0 0.0
    %116 = vmatprep.subr.mxu0 0.0
    %117 = vmatpush2.msra.mxu0 0.0
    %118 = vmatprep.subr.mxu0 0.0
    %119 = vmatpush2.msra.mxu0 0.0
    %120 = vmatprep.subr.mxu0 0.0
    %121 = vmatpush2.msra.mxu0 0.0
    %122 = vmatprep.subr.mxu0 0.0
    %123 = vmatpush2.msra.mxu0 0.0
    %124 = vmatprep.subr.mxu0 0.0
    %125 = vmatpush2.msra.mxu0 0.0
    %126 = vmatprep.subr.mxu0 0.0
    %127 = vmatpush2.msra.mxu0 0.0
    %128 = vmatprep.subr.mxu0 0.0
    %129 = vmatpush2.msra.mxu0 0.0
    %130 = vmatprep.subr.mxu0 0.0
    %131 = vmatpush2.msra.mxu0 0.0
    %132 = vmatprep.subr.mxu0 0.0
    %133 = vmatpush2.msra.mxu0 0.0
    %134 = vmatprep.mubr.f32.mxu0 0.0
    %135 = vmatmul.mubr.f32.gmra.mxu0 %v61
    %v136 = vpop.f32.mrf.mxu0
    %v137 = vadd.f32 %v57, %v136
    %v138 = vpop.f32.mrf.mxu0
    %139 = vmatprep.mubr.f32.mxu0 0.0
    %140 = vmatmul.mubr.f32.gmra.mxu0 %v64
    %v141 = vpop.f32.mrf.mxu0
    %v142 = vadd.f32 %v57, %v141
    %v143 = vpop.f32.mrf.mxu0
    %144 = vdwg.mxu0
    %s145 = scalar_lea.vmem %s1, 4
    %v146 = vld [vmem:[%s145] sm:$0xf]
    %s147 = scalar_lea.vmem %s3, 1
    %v148 = vld [vmem:[%s147] sm:$0x1]
    %s149 = scalar_lea.vmem %s4, 1
    %v150 = vld [vmem:[%s149] sm:$0x1]
    %v151 = vadd.f32 %v148, %v150
    %v153 = vlaneseq
    %v154 = vshrl.u32 %v153, 7
    %v155 = vsub.s32 0, %v154
    %v156 = vrot.slane %v151, %v155
    %v159 = vsel %vm66, %v146, 0
    %161 = vmatprep.subr.mxu0 0.0
    %162 = vmatpush1.msra.mxu0 0.0
    %163 = vmatprep.subr.mxu0 0.0
    %164 = vmatpush1.msra.mxu0 0.0
    %165 = vmatprep.subr.mxu0 0.0
    %166 = vmatpush1.msra.mxu0 0.0
    %167 = vmatprep.subr.mxu0 0.0
    %168 = vmatpush1.msra.mxu0 0.0
    %169 = vmatprep.subr.mxu0 0.0
    %170 = vmatpush1.msra.mxu0 0.0
    %171 = vmatprep.subr.mxu0 0.0
    %172 = vmatpush1.msra.mxu0 0.0
    %173 = vmatprep.subr.mxu0 0.0
    %174 = vmatpush1.msra.mxu0 0.0
    %175 = vmatprep.subr.mxu0 0.0
    %176 = vmatpush1.msra.mxu0 0.0
    %177 = vmatprep.subr.mxu0 0.0
    %178 = vmatpush1.msra.mxu0 0.0
    %179 = vmatprep.subr.mxu0 0.0
    %180 = vmatpush1.msra.mxu0 0.0
    %181 = vmatprep.subr.mxu0 0.0
    %182 = vmatpush1.msra.mxu0 0.0
    %183 = vmatprep.subr.mxu0 0.0
    %184 = vmatpush1.msra.mxu0 0.0
    %185 = vmatprep.subr.mxu0 0.0
    %186 = vmatpush1.msra.mxu0 0.0
    %187 = vmatprep.subr.mxu0 0.0
    %188 = vmatpush1.msra.mxu0 0.0
    %189 = vmatprep.subr.mxu0 0.0
    %190 = vmatpush1.msra.mxu0 0.0
    %191 = vmatprep.subr.mxu0 0.0
    %192 = vmatpush1.msra.mxu0 %v159
    %193 = vmatprep.subr.mxu0 0.0
    %194 = vmatpush2.msra.mxu0 0.0
    %195 = vmatprep.subr.mxu0 0.0
    %196 = vmatpush2.msra.mxu0 0.0
    %197 = vmatprep.subr.mxu0 0.0
    %198 = vmatpush2.msra.mxu0 0.0
    %199 = vmatprep.subr.mxu0 0.0
    %200 = vmatpush2.msra.mxu0 0.0
    %201 = vmatprep.subr.mxu0 0.0
    %202 = vmatpush2.msra.mxu0 0.0
    %203 = vmatprep.subr.mxu0 0.0
    %204 = vmatpush2.msra.mxu0 0.0
    %205 = vmatprep.subr.mxu0 0.0
    %206 = vmatpush2.msra.mxu0 0.0
    %207 = vmatprep.subr.mxu0 0.0
    %208 = vmatpush2.msra.mxu0 0.0
    %209 = vmatprep.subr.mxu0 0.0
    %210 = vmatpush2.msra.mxu0 0.0
    %211 = vmatprep.subr.mxu0 0.0
    %212 = vmatpush2.msra.mxu0 0.0
    %213 = vmatprep.subr.mxu0 0.0
    %214 = vmatpush2.msra.mxu0 0.0
    %215 = vmatprep.subr.mxu0 0.0
    %216 = vmatpush2.msra.mxu0 0.0
    %217 = vmatprep.subr.mxu0 0.0
    %218 = vmatpush2.msra.mxu0 0.0
    %219 = vmatprep.subr.mxu0 0.0
    %220 = vmatpush2.msra.mxu0 0.0
    %221 = vmatprep.subr.mxu0 0.0
    %222 = vmatpush2.msra.mxu0 0.0
    %223 = vmatprep.subr.mxu0 0.0
    %224 = vmatpush2.msra.mxu0 0.0
    %225 = vmatprep.mubr.f32.mxu0 0.0
    %226 = vmatmul.mubr.f32.gmra.mxu0 %v61
    %v227 = vpop.f32.mrf.mxu0
    %v228 = vadd.f32 %v156, %v227
    %v229 = vpop.f32.mrf.mxu0
    %230 = vmatprep.mubr.f32.mxu0 0.0
    %231 = vmatmul.mubr.f32.gmra.mxu0 %v64
    %v232 = vpop.f32.mrf.mxu0
    %v233 = vadd.f32 %v156, %v232
    %v234 = vpop.f32.mrf.mxu0
    %235 = vdwg.mxu0
    %s236 = scalar_lea.vmem %s1, 8
    %v237 = vld [vmem:[%s236] sm:$0xf]
    %s238 = scalar_lea.vmem %s3, 2
    %v239 = vld [vmem:[%s238] sm:$0x1]
    %v241 = vlaneseq
    %v242 = vshrl.u32 %v241, 7
    %v243 = vsub.s32 0, %v242
    %v244 = vrot.slane %v239, %v243
    %v247 = vsel %vm66, %v237, 0
    %249 = vmatprep.subr.mxu0 0.0
    %250 = vmatpush1.msra.mxu0 0.0
    %251 = vmatprep.subr.mxu0 0.0
    %252 = vmatpush1.msra.mxu0 0.0
    %253 = vmatprep.subr.mxu0 0.0
    %254 = vmatpush1.msra.mxu0 0.0
    %255 = vmatprep.subr.mxu0 0.0
    %256 = vmatpush1.msra.mxu0 0.0
    %257 = vmatprep.subr.mxu0 0.0
    %258 = vmatpush1.msra.mxu0 0.0
    %259 = vmatprep.subr.mxu0 0.0
    %260 = vmatpush1.msra.mxu0 0.0
    %261 = vmatprep.subr.mxu0 0.0
    %262 = vmatpush1.msra.mxu0 0.0
    %263 = vmatprep.subr.mxu0 0.0
    %264 = vmatpush1.msra.mxu0 0.0
    %265 = vmatprep.subr.mxu0 0.0
    %266 = vmatpush1.msra.mxu0 0.0
    %267 = vmatprep.subr.mxu0 0.0
    %268 = vmatpush1.msra.mxu0 0.0
    %269 = vmatprep.subr.mxu0 0.0
    %270 = vmatpush1.msra.mxu0 0.0
    %271 = vmatprep.subr.mxu0 0.0
    %272 = vmatpush1.msra.mxu0 0.0
    %273 = vmatprep.subr.mxu0 0.0
    %274 = vmatpush1.msra.mxu0 0.0
    %275 = vmatprep.subr.mxu0 0.0
    %276 = vmatpush1.msra.mxu0 0.0
    %277 = vmatprep.subr.mxu0 0.0
    %278 = vmatpush1.msra.mxu0 0.0
    %279 = vmatprep.subr.mxu0 0.0
    %280 = vmatpush1.msra.mxu0 %v247
    %281 = vmatprep.subr.mxu0 0.0
    %282 = vmatpush2.msra.mxu0 0.0
    %283 = vmatprep.subr.mxu0 0.0
    %284 = vmatpush2.msra.mxu0 0.0
    %285 = vmatprep.subr.mxu0 0.0
    %286 = vmatpush2.msra.mxu0 0.0
    %287 = vmatprep.subr.mxu0 0.0
    %288 = vmatpush2.msra.mxu0 0.0
    %289 = vmatprep.subr.mxu0 0.0
    %290 = vmatpush2.msra.mxu0 0.0
    %291 = vmatprep.subr.mxu0 0.0
    %292 = vmatpush2.msra.mxu0 0.0
    %293 = vmatprep.subr.mxu0 0.0
    %294 = vmatpush2.msra.mxu0 0.0
    %295 = vmatprep.subr.mxu0 0.0
    %296 = vmatpush2.msra.mxu0 0.0
    %297 = vmatprep.subr.mxu0 0.0
    %298 = vmatpush2.msra.mxu0 0.0
    %299 = vmatprep.subr.mxu0 0.0
    %300 = vmatpush2.msra.mxu0 0.0
    %301 = vmatprep.subr.mxu0 0.0
    %302 = vmatpush2.msra.mxu0 0.0
    %303 = vmatprep.subr.mxu0 0.0
    %304 = vmatpush2.msra.mxu0 0.0
    %305 = vmatprep.subr.mxu0 0.0
    %306 = vmatpush2.msra.mxu0 0.0
    %307 = vmatprep.subr.mxu0 0.0
    %308 = vmatpush2.msra.mxu0 0.0
    %309 = vmatprep.subr.mxu0 0.0
    %310 = vmatpush2.msra.mxu0 0.0
    %311 = vmatprep.subr.mxu0 0.0
    %312 = vmatpush2.msra.mxu0 0.0
    %313 = vmatprep.mubr.f32.mxu0 0.0
    %314 = vmatmul.mubr.f32.gmra.mxu0 %v61
    %v315 = vpop.f32.mrf.mxu0
    %v316 = vadd.f32 %v244, %v315
    %v317 = vpop.f32.mrf.mxu0
    %318 = vmatprep.mubr.f32.mxu0 0.0
    %319 = vmatmul.mubr.f32.gmra.mxu0 %v64
    %v320 = vpop.f32.mrf.mxu0
    %v321 = vadd.f32 %v244, %v320
    %v322 = vpop.f32.mrf.mxu0
    %323 = vdwg.mxu0
    %v324 = vld [vmem:[#allocation2] sm:$0xff]
    %v325 = vld [vmem:[#allocation2 + $0x8] sm:$0xff]
    %v326 = vld [vmem:[#allocation2 + $0x10] sm:$0xff]
    %v327 = vld [vmem:[#allocation2 + $0x18] sm:$0xff]
    %s328 = scalar_lea.vmem [#allocation2], 32
    %v329 = vld [vmem:[%s328] sm:$0xff]
    %v330 = vld [vmem:[%s328 + $0x8] sm:$0xff]
    %v331 = vld [vmem:[%s328 + $0x10] sm:$0xff]
    %v332 = vld [vmem:[%s328 + $0x18] sm:$0xff]
    %s333 = scalar_lea.vmem [#allocation2], 64
    %v334 = vld [vmem:[%s333] sm:$0xff]
    %v335 = vld [vmem:[%s333 + $0x8] sm:$0xff]
    %v336 = vld [vmem:[%s333 + $0x10] sm:$0xff]
    %v337 = vld [vmem:[%s333 + $0x18] sm:$0xff]
    %s338 = scalar_lea.vmem %s4, 2
    %v339 = vld [vmem:[%s338] sm:$0x1]
    %v340 = vxor.u32 %v137, 2147483648
    %v341 = vmul.f32 %v340, 1.442695
    %v342 = vpow.pop %v341
    %v343 = vadd.f32 %v342, 1.0
    %v344 = vrcp.pop %v343
    %v345 = vmul.f32 1.0, %v344
    %v346 = vxor.u32 %v228, 2147483648
    %v347 = vmul.f32 %v346, 1.442695
    %v348 = vpow.pop %v347
    %v349 = vadd.f32 %v348, 1.0
    %v350 = vrcp.pop %v349
    %v351 = vmul.f32 1.0, %v350
    %v353 = vlaneseq
    %v354 = vshrl.u32 %v353, 7
    %v355 = vsub.s32 0, %v354
    %v356 = vrot.slane %v339, %v355
    %v358 = vmul.f32 %v345, %v356
    %v359 = vadd.f32 %v316, %v358
    %v360 = vtanh.pop %v359
    %v361 = vmul.f32 %v351, %v360
    %v362 = vsub.f32 %v360, %v361
    %vm363 = vcmask 261120
    %v365 = vsel %vm363, %v362, 0
    %367 = vmatprep.subr.mxu0 0.0
    %368 = vmatpush1.msra.mxu0 0.0
    %369 = vmatprep.subr.mxu0 0.0
    %370 = vmatpush1.msra.mxu0 0.0
    %371 = vmatprep.subr.mxu0 0.0
    %372 = vmatpush1.msra.mxu0 0.0
    %373 = vmatprep.subr.mxu0 0.0
    %374 = vmatpush1.msra.mxu0 0.0
    %375 = vmatprep.subr.mxu0 0.0
    %376 = vmatpush1.msra.mxu0 0.0
    %377 = vmatprep.subr.mxu0 0.0
    %378 = vmatpush1.msra.mxu0 0.0
    %379 = vmatprep.subr.mxu0 0.0
    %380 = vmatpush1.msra.mxu0 0.0
    %381 = vmatprep.subr.mxu0 0.0
    %382 = vmatpush1.msra.mxu0 0.0
    %383 = vmatprep.subr.mxu0 0.0
    %384 = vmatpush1.msra.mxu0 0.0
    %385 = vmatprep.subr.mxu0 0.0
    %386 = vmatpush1.msra.mxu0 0.0
    %387 = vmatprep.subr.mxu0 0.0
    %388 = vmatpush1.msra.mxu0 0.0
    %389 = vmatprep.subr.mxu0 0.0
    %390 = vmatpush1.msra.mxu0 0.0
    %391 = vmatprep.subr.mxu0 0.0
    %392 = vmatpush1.msra.mxu0 %v327
    %393 = vmatprep.subr.mxu0 0.0
    %394 = vmatpush1.msra.mxu0 %v326
    %395 = vmatprep.subr.mxu0 0.0
    %396 = vmatpush1.msra.mxu0 %v325
    %397 = vmatprep.subr.mxu0 0.0
    %398 = vmatpush1.msra.mxu0 %v324
    %399 = vmatprep.subr.mxu0 0.0
    %400 = vmatpush2.msra.mxu0 0.0
    %401 = vmatprep.subr.mxu0 0.0
    %402 = vmatpush2.msra.mxu0 0.0
    %403 = vmatprep.subr.mxu0 0.0
    %404 = vmatpush2.msra.mxu0 0.0
    %405 = vmatprep.subr.mxu0 0.0
    %406 = vmatpush2.msra.mxu0 0.0
    %407 = vmatprep.subr.mxu0 0.0
    %408 = vmatpush2.msra.mxu0 0.0
    %409 = vmatprep.subr.mxu0 0.0
    %410 = vmatpush2.msra.mxu0 0.0
    %411 = vmatprep.subr.mxu0 0.0
    %412 = vmatpush2.msra.mxu0 0.0
    %413 = vmatprep.subr.mxu0 0.0
    %414 = vmatpush2.msra.mxu0 0.0
    %415 = vmatprep.subr.mxu0 0.0
    %416 = vmatpush2.msra.mxu0 0.0
    %417 = vmatprep.subr.mxu0 0.0
    %418 = vmatpush2.msra.mxu0 0.0
    %419 = vmatprep.subr.mxu0 0.0
    %420 = vmatpush2.msra.mxu0 0.0
    %421 = vmatprep.subr.mxu0 0.0
    %422 = vmatpush2.msra.mxu0 0.0
    %423 = vmatprep.subr.mxu0 0.0
    %424 = vmatpush2.msra.mxu0 0.0
    %425 = vmatprep.subr.mxu0 0.0
    %426 = vmatpush2.msra.mxu0 0.0
    %427 = vmatprep.subr.mxu0 0.0
    %428 = vmatpush2.msra.mxu0 0.0
    %429 = vmatprep.subr.mxu0 0.0
    %430 = vmatpush2.msra.mxu0 0.0
    %431 = vmatprep.mubr.f32.mxu0 0.0
    %432 = vmatmul.mubr.f32.gmra.mxu0 %v365
    %v433 = vpop.f32.mrf.mxu0
    %v434 = vadd.f32 0.0, %v433
    %v435 = vpop.f32.mrf.mxu0
    %436 = vdwg.mxu0
    %437 = vmatprep.subr.mxu0 0.0
    %438 = vmatpush1.msra.mxu0 0.0
    %439 = vmatprep.subr.mxu0 0.0
    %440 = vmatpush1.msra.mxu0 0.0
    %441 = vmatprep.subr.mxu0 0.0
    %442 = vmatpush1.msra.mxu0 0.0
    %443 = vmatprep.subr.mxu0 0.0
    %444 = vmatpush1.msra.mxu0 0.0
    %445 = vmatprep.subr.mxu0 0.0
    %446 = vmatpush1.msra.mxu0 0.0
    %447 = vmatprep.subr.mxu0 0.0
    %448 = vmatpush1.msra.mxu0 0.0
    %449 = vmatprep.subr.mxu0 0.0
    %450 = vmatpush1.msra.mxu0 0.0
    %451 = vmatprep.subr.mxu0 0.0
    %452 = vmatpush1.msra.mxu0 0.0
    %453 = vmatprep.subr.mxu0 0.0
    %454 = vmatpush1.msra.mxu0 0.0
    %455 = vmatprep.subr.mxu0 0.0
    %456 = vmatpush1.msra.mxu0 0.0
    %457 = vmatprep.subr.mxu0 0.0
    %458 = vmatpush1.msra.mxu0 0.0
    %459 = vmatprep.subr.mxu0 0.0
    %460 = vmatpush1.msra.mxu0 0.0
    %461 = vmatprep.subr.mxu0 0.0
    %462 = vmatpush1.msra.mxu0 %v332
    %463 = vmatprep.subr.mxu0 0.0
    %464 = vmatpush1.msra.mxu0 %v331
    %465 = vmatprep.subr.mxu0 0.0
    %466 = vmatpush1.msra.mxu0 %v330
    %467 = vmatprep.subr.mxu0 0.0
    %468 = vmatpush1.msra.mxu0 %v329
    %469 = vmatprep.subr.mxu0 0.0
    %470 = vmatpush2.msra.mxu0 0.0
    %471 = vmatprep.subr.mxu0 0.0
    %472 = vmatpush2.msra.mxu0 0.0
    %473 = vmatprep.subr.mxu0 0.0
    %474 = vmatpush2.msra.mxu0 0.0
    %475 = vmatprep.subr.mxu0 0.0
    %476 = vmatpush2.msra.mxu0 0.0
    %477 = vmatprep.subr.mxu0 0.0
    %478 = vmatpush2.msra.mxu0 0.0
    %479 = vmatprep.subr.mxu0 0.0
    %480 = vmatpush2.msra.mxu0 0.0
    %481 = vmatprep.subr.mxu0 0.0
    %482 = vmatpush2.msra.mxu0 0.0
    %483 = vmatprep.subr.mxu0 0.0
    %484 = vmatpush2.msra.mxu0 0.0
    %485 = vmatprep.subr.mxu0 0.0
    %486 = vmatpush2.msra.mxu0 0.0
    %487 = vmatprep.subr.mxu0 0.0
    %488 = vmatpush2.msra.mxu0 0.0
    %489 = vmatprep.subr.mxu0 0.0
    %490 = vmatpush2.msra.mxu0 0.0
    %491 = vmatprep.subr.mxu0 0.0
    %492 = vmatpush2.msra.mxu0 0.0
    %493 = vmatprep.subr.mxu0 0.0
    %494 = vmatpush2.msra.mxu0 0.0
    %495 = vmatprep.subr.mxu0 0.0
    %496 = vmatpush2.msra.mxu0 0.0
    %497 = vmatprep.subr.mxu0 0.0
    %498 = vmatpush2.msra.mxu0 0.0
    %499 = vmatprep.subr.mxu0 0.0
    %500 = vmatpush2.msra.mxu0 0.0
    %501 = vmatprep.mubr.f32.mxu0 0.0
    %502 = vmatmul.mubr.f32.gmra.mxu0 %v365
    %v503 = vpop.f32.mrf.mxu0
    %v504 = vadd.f32 0.0, %v503
    %v505 = vpop.f32.mrf.mxu0
    %506 = vdwg.mxu0
    %507 = vmatprep.subr.mxu0 0.0
    %508 = vmatpush1.msra.mxu0 0.0
    %509 = vmatprep.subr.mxu0 0.0
    %510 = vmatpush1.msra.mxu0 0.0
    %511 = vmatprep.subr.mxu0 0.0
    %512 = vmatpush1.msra.mxu0 0.0
    %513 = vmatprep.subr.mxu0 0.0
    %514 = vmatpush1.msra.mxu0 0.0
    %515 = vmatprep.subr.mxu0 0.0
    %516 = vmatpush1.msra.mxu0 0.0
    %517 = vmatprep.subr.mxu0 0.0
    %518 = vmatpush1.msra.mxu0 0.0
    %519 = vmatprep.subr.mxu0 0.0
    %520 = vmatpush1.msra.mxu0 0.0
    %521 = vmatprep.subr.mxu0 0.0
    %522 = vmatpush1.msra.mxu0 0.0
    %523 = vmatprep.subr.mxu0 0.0
    %524 = vmatpush1.msra.mxu0 0.0
    %525 = vmatprep.subr.mxu0 0.0
    %526 = vmatpush1.msra.mxu0 0.0
    %527 = vmatprep.subr.mxu0 0.0
    %528 = vmatpush1.msra.mxu0 0.0
    %529 = vmatprep.subr.mxu0 0.0
    %530 = vmatpush1.msra.mxu0 0.0
    %531 = vmatprep.subr.mxu0 0.0
    %532 = vmatpush1.msra.mxu0 %v337
    %533 = vmatprep.subr.mxu0 0.0
    %534 = vmatpush1.msra.mxu0 %v336
    %535 = vmatprep.subr.mxu0 0.0
    %536 = vmatpush1.msra.mxu0 %v335
    %537 = vmatprep.subr.mxu0 0.0
    %538 = vmatpush1.msra.mxu0 %v334
    %539 = vmatprep.subr.mxu0 0.0
    %540 = vmatpush2.msra.mxu0 0.0
    %541 = vmatprep.subr.mxu0 0.0
    %542 = vmatpush2.msra.mxu0 0.0
    %543 = vmatprep.subr.mxu0 0.0
    %544 = vmatpush2.msra.mxu0 0.0
    %545 = vmatprep.subr.mxu0 0.0
    %546 = vmatpush2.msra.mxu0 0.0
    %547 = vmatprep.subr.mxu0 0.0
    %548 = vmatpush2.msra.mxu0 0.0
    %549 = vmatprep.subr.mxu0 0.0
    %550 = vmatpush2.msra.mxu0 0.0
    %551 = vmatprep.subr.mxu0 0.0
    %552 = vmatpush2.msra.mxu0 0.0
    %553 = vmatprep.subr.mxu0 0.0
    %554 = vmatpush2.msra.mxu0 0.0
    %555 = vmatprep.subr.mxu0 0.0
    %556 = vmatpush2.msra.mxu0 0.0
    %557 = vmatprep.subr.mxu0 0.0
    %558 = vmatpush2.msra.mxu0 0.0
    %559 = vmatprep.subr.mxu0 0.0
    %560 = vmatpush2.msra.mxu0 0.0
    %561 = vmatprep.subr.mxu0 0.0
    %562 = vmatpush2.msra.mxu0 0.0
    %563 = vmatprep.subr.mxu0 0.0
    %564 = vmatpush2.msra.mxu0 0.0
    %565 = vmatprep.subr.mxu0 0.0
    %566 = vmatpush2.msra.mxu0 0.0
    %567 = vmatprep.subr.mxu0 0.0
    %568 = vmatpush2.msra.mxu0 0.0
    %569 = vmatprep.subr.mxu0 0.0
    %570 = vmatpush2.msra.mxu0 0.0
    %571 = vmatprep.mubr.f32.mxu0 0.0
    %572 = vmatmul.mubr.f32.gmra.mxu0 %v365
    %v573 = vpop.f32.mrf.mxu0
    %v574 = vadd.f32 %v356, %v573
    %v575 = vpop.f32.mrf.mxu0
    %576 = vdwg.mxu0
    %v578 = vrot.slane %v434, 6
    %v580 = vadd.f32 %v137, %v578
    %v581 = vxor.u32 %v580, 2147483648
    %v582 = vmul.f32 %v581, 1.442695
    %v583 = vpow.pop %v582
    %v584 = vadd.f32 %v583, 1.0
    %v585 = vrcp.pop %v584
    %v586 = vmul.f32 1.0, %v585
    %v588 = vrot.slane %v504, 6
    %v590 = vadd.f32 %v228, %v588
    %v591 = vxor.u32 %v590, 2147483648
    %v592 = vmul.f32 %v591, 1.442695
    %v593 = vpow.pop %v592
    %v594 = vadd.f32 %v593, 1.0
    %v595 = vrcp.pop %v594
    %v596 = vmul.f32 1.0, %v595
    %v598 = vrot.slane %v574, 6
    %v600 = vmul.f32 %v586, %v598
    %v601 = vadd.f32 %v316, %v600
    %v602 = vtanh.pop %v601
    %v604 = vrot.slane %v602, 2
    %v606 = vsub.f32 %v362, %v604
    %v608 = vrot.slane %v606, 6
    %v610 = vmul.f32 %v596, %v608
    %v611 = vadd.f32 %v602, %v610
    %v613 = vrot.slane %v611, 2
    %v614 = vsel %vm363, %v613, 0
    %616 = vmatprep.subr.mxu0 0.0
    %617 = vmatpush1.msra.mxu0 0.0
    %618 = vmatprep.subr.mxu0 0.0
    %619 = vmatpush1.msra.mxu0 0.0
    %620 = vmatprep.subr.mxu0 0.0
    %621 = vmatpush1.msra.mxu0 0.0
    %622 = vmatprep.subr.mxu0 0.0
    %623 = vmatpush1.msra.mxu0 0.0
    %624 = vmatprep.subr.mxu0 0.0
    %625 = vmatpush1.msra.mxu0 0.0
    %626 = vmatprep.subr.mxu0 0.0
    %627 = vmatpush1.msra.mxu0 0.0
    %628 = vmatprep.subr.mxu0 0.0
    %629 = vmatpush1.msra.mxu0 0.0
    %630 = vmatprep.subr.mxu0 0.0
    %631 = vmatpush1.msra.mxu0 0.0
    %632 = vmatprep.subr.mxu0 0.0
    %633 = vmatpush1.msra.mxu0 0.0
    %634 = vmatprep.subr.mxu0 0.0
    %635 = vmatpush1.msra.mxu0 0.0
    %636 = vmatprep.subr.mxu0 0.0
    %637 = vmatpush1.msra.mxu0 0.0
    %638 = vmatprep.subr.mxu0 0.0
    %639 = vmatpush1.msra.mxu0 0.0
    %640 = vmatprep.subr.mxu0 0.0
    %641 = vmatpush1.msra.mxu0 %v327
    %642 = vmatprep.subr.mxu0 0.0
    %643 = vmatpush1.msra.mxu0 %v326
    %644 = vmatprep.subr.mxu0 0.0
    %645 = vmatpush1.msra.mxu0 %v325
    %646 = vmatprep.subr.mxu0 0.0
    %647 = vmatpush1.msra.mxu0 %v324
    %648 = vmatprep.subr.mxu0 0.0
    %649 = vmatpush2.msra.mxu0 0.0
    %650 = vmatprep.subr.mxu0 0.0
    %651 = vmatpush2.msra.mxu0 0.0
    %652 = vmatprep.subr.mxu0 0.0
    %653 = vmatpush2.msra.mxu0 0.0
    %654 = vmatprep.subr.mxu0 0.0
    %655 = vmatpush2.msra.mxu0 0.0
    %656 = vmatprep.subr.mxu0 0.0
    %657 = vmatpush2.msra.mxu0 0.0
    %658 = vmatprep.subr.mxu0 0.0
    %659 = vmatpush2.msra.mxu0 0.0
    %660 = vmatprep.subr.mxu0 0.0
    %661 = vmatpush2.msra.mxu0 0.0
    %662 = vmatprep.subr.mxu0 0.0
    %663 = vmatpush2.msra.mxu0 0.0
    %664 = vmatprep.subr.mxu0 0.0
    %665 = vmatpush2.msra.mxu0 0.0
    %666 = vmatprep.subr.mxu0 0.0
    %667 = vmatpush2.msra.mxu0 0.0
    %668 = vmatprep.subr.mxu0 0.0
    %669 = vmatpush2.msra.mxu0 0.0
    %670 = vmatprep.subr.mxu0 0.0
    %671 = vmatpush2.msra.mxu0 0.0
    %672 = vmatprep.subr.mxu0 0.0
    %673 = vmatpush2.msra.mxu0 0.0
    %674 = vmatprep.subr.mxu0 0.0
    %675 = vmatpush2.msra.mxu0 0.0
    %676 = vmatprep.subr.mxu0 0.0
    %677 = vmatpush2.msra.mxu0 0.0
    %678 = vmatprep.subr.mxu0 0.0
    %679 = vmatpush2.msra.mxu0 0.0
    %680 = vmatprep.mubr.f32.mxu0 0.0
    %681 = vmatmul.mubr.f32.gmra.mxu0 %v614
    %v682 = vpop.f32.mrf.mxu0
    %v683 = vadd.f32 0.0, %v682
    %v684 = vpop.f32.mrf.mxu0
    %685 = vdwg.mxu0
    %686 = vmatprep.subr.mxu0 0.0
    %687 = vmatpush1.msra.mxu0 0.0
    %688 = vmatprep.subr.mxu0 0.0
    %689 = vmatpush1.msra.mxu0 0.0
    %690 = vmatprep.subr.mxu0 0.0
    %691 = vmatpush1.msra.mxu0 0.0
    %692 = vmatprep.subr.mxu0 0.0
    %693 = vmatpush1.msra.mxu0 0.0
    %694 = vmatprep.subr.mxu0 0.0
    %695 = vmatpush1.msra.mxu0 0.0
    %696 = vmatprep.subr.mxu0 0.0
    %697 = vmatpush1.msra.mxu0 0.0
    %698 = vmatprep.subr.mxu0 0.0
    %699 = vmatpush1.msra.mxu0 0.0
    %700 = vmatprep.subr.mxu0 0.0
    %701 = vmatpush1.msra.mxu0 0.0
    %702 = vmatprep.subr.mxu0 0.0
    %703 = vmatpush1.msra.mxu0 0.0
    %704 = vmatprep.subr.mxu0 0.0
    %705 = vmatpush1.msra.mxu0 0.0
    %706 = vmatprep.subr.mxu0 0.0
    %707 = vmatpush1.msra.mxu0 0.0
    %708 = vmatprep.subr.mxu0 0.0
    %709 = vmatpush1.msra.mxu0 0.0
    %710 = vmatprep.subr.mxu0 0.0
    %711 = vmatpush1.msra.mxu0 %v332
    %712 = vmatprep.subr.mxu0 0.0
    %713 = vmatpush1.msra.mxu0 %v331
    %714 = vmatprep.subr.mxu0 0.0
    %715 = vmatpush1.msra.mxu0 %v330
    %716 = vmatprep.subr.mxu0 0.0
    %717 = vmatpush1.msra.mxu0 %v329
    %718 = vmatprep.subr.mxu0 0.0
    %719 = vmatpush2.msra.mxu0 0.0
    %720 = vmatprep.subr.mxu0 0.0
    %721 = vmatpush2.msra.mxu0 0.0
    %722 = vmatprep.subr.mxu0 0.0
    %723 = vmatpush2.msra.mxu0 0.0
    %724 = vmatprep.subr.mxu0 0.0
    %725 = vmatpush2.msra.mxu0 0.0
    %726 = vmatprep.subr.mxu0 0.0
    %727 = vmatpush2.msra.mxu0 0.0
    %728 = vmatprep.subr.mxu0 0.0
    %729 = vmatpush2.msra.mxu0 0.0
    %730 = vmatprep.subr.mxu0 0.0
    %731 = vmatpush2.msra.mxu0 0.0
    %732 = vmatprep.subr.mxu0 0.0
    %733 = vmatpush2.msra.mxu0 0.0
    %734 = vmatprep.subr.mxu0 0.0
    %735 = vmatpush2.msra.mxu0 0.0
    %736 = vmatprep.subr.mxu0 0.0
    %737 = vmatpush2.msra.mxu0 0.0
    %738 = vmatprep.subr.mxu0 0.0
    %739 = vmatpush2.msra.mxu0 0.0
    %740 = vmatprep.subr.mxu0 0.0
    %741 = vmatpush2.msra.mxu0 0.0
    %742 = vmatprep.subr.mxu0 0.0
    %743 = vmatpush2.msra.mxu0 0.0
    %744 = vmatprep.subr.mxu0 0.0
    %745 = vmatpush2.msra.mxu0 0.0
    %746 = vmatprep.subr.mxu0 0.0
    %747 = vmatpush2.msra.mxu0 0.0
    %748 = vmatprep.subr.mxu0 0.0
    %749 = vmatpush2.msra.mxu0 0.0
    %750 = vmatprep.mubr.f32.mxu0 0.0
    %751 = vmatmul.mubr.f32.gmra.mxu0 %v614
    %v752 = vpop.f32.mrf.mxu0
    %v753 = vadd.f32 0.0, %v752
    %v754 = vpop.f32.mrf.mxu0
    %755 = vdwg.mxu0
    %756 = vmatprep.subr.mxu0 0.0
    %757 = vmatpush1.msra.mxu0 0.0
    %758 = vmatprep.subr.mxu0 0.0
    %759 = vmatpush1.msra.mxu0 0.0
    %760 = vmatprep.subr.mxu0 0.0
    %761 = vmatpush1.msra.mxu0 0.0
    %762 = vmatprep.subr.mxu0 0.0
    %763 = vmatpush1.msra.mxu0 0.0
    %764 = vmatprep.subr.mxu0 0.0
    %765 = vmatpush1.msra.mxu0 0.0
    %766 = vmatprep.subr.mxu0 0.0
    %767 = vmatpush1.msra.mxu0 0.0
    %768 = vmatprep.subr.mxu0 0.0
    %769 = vmatpush1.msra.mxu0 0.0
    %770 = vmatprep.subr.mxu0 0.0
    %771 = vmatpush1.msra.mxu0 0.0
    %772 = vmatprep.subr.mxu0 0.0
    %773 = vmatpush1.msra.mxu0 0.0
    %774 = vmatprep.subr.mxu0 0.0
    %775 = vmatpush1.msra.mxu0 0.0
    %776 = vmatprep.subr.mxu0 0.0
    %777 = vmatpush1.msra.mxu0 0.0
    %778 = vmatprep.subr.mxu0 0.0
    %779 = vmatpush1.msra.mxu0 0.0
    %780 = vmatprep.subr.mxu0 0.0
    %781 = vmatpush1.msra.mxu0 %v337
    %782 = vmatprep.subr.mxu0 0.0
    %783 = vmatpush1.msra.mxu0 %v336
    %784 = vmatprep.subr.mxu0 0.0
    %785 = vmatpush1.msra.mxu0 %v335
    %786 = vmatprep.subr.mxu0 0.0
    %787 = vmatpush1.msra.mxu0 %v334
    %788 = vmatprep.subr.mxu0 0.0
    %789 = vmatpush2.msra.mxu0 0.0
    %790 = vmatprep.subr.mxu0 0.0
    %791 = vmatpush2.msra.mxu0 0.0
    %792 = vmatprep.subr.mxu0 0.0
    %793 = vmatpush2.msra.mxu0 0.0
    %794 = vmatprep.subr.mxu0 0.0
    %795 = vmatpush2.msra.mxu0 0.0
    %796 = vmatprep.subr.mxu0 0.0
    %797 = vmatpush2.msra.mxu0 0.0
    %798 = vmatprep.subr.mxu0 0.0
    %799 = vmatpush2.msra.mxu0 0.0
    %800 = vmatprep.subr.mxu0 0.0
    %801 = vmatpush2.msra.mxu0 0.0
    %802 = vmatprep.subr.mxu0 0.0
    %803 = vmatpush2.msra.mxu0 0.0
    %804 = vmatprep.subr.mxu0 0.0
    %805 = vmatpush2.msra.mxu0 0.0
    %806 = vmatprep.subr.mxu0 0.0
    %807 = vmatpush2.msra.mxu0 0.0
    %808 = vmatprep.subr.mxu0 0.0
    %809 = vmatpush2.msra.mxu0 0.0
    %810 = vmatprep.subr.mxu0 0.0
    %811 = vmatpush2.msra.mxu0 0.0
    %812 = vmatprep.subr.mxu0 0.0
    %813 = vmatpush2.msra.mxu0 0.0
    %814 = vmatprep.subr.mxu0 0.0
    %815 = vmatpush2.msra.mxu0 0.0
    %816 = vmatprep.subr.mxu0 0.0
    %817 = vmatpush2.msra.mxu0 0.0
    %818 = vmatprep.subr.mxu0 0.0
    %819 = vmatpush2.msra.mxu0 0.0
    %820 = vmatprep.mubr.f32.mxu0 0.0
    %821 = vmatmul.mubr.f32.gmra.mxu0 %v614
    %v822 = vpop.f32.mrf.mxu0
    %v823 = vadd.f32 %v356, %v822
    %v824 = vpop.f32.mrf.mxu0
    %825 = vdwg.mxu0
    %v827 = vrot.slane %v683, 4
    %v829 = vadd.f32 %v137, %v827
    %v830 = vxor.u32 %v829, 2147483648
    %v831 = vmul.f32 %v830, 1.442695
    %v832 = vpow.pop %v831
    %v833 = vadd.f32 %v832, 1.0
    %v834 = vrcp.pop %v833
    %v835 = vmul.f32 1.0, %v834
    %v837 = vrot.slane %v753, 4
    %v839 = vadd.f32 %v228, %v837
    %v840 = vxor.u32 %v839, 2147483648
    %v841 = vmul.f32 %v840, 1.442695
    %v842 = vpow.pop %v841
    %v843 = vadd.f32 %v842, 1.0
    %v844 = vrcp.pop %v843
    %v845 = vmul.f32 1.0, %v844
    %v847 = vrot.slane %v823, 4
    %v849 = vmul.f32 %v835, %v847
    %v850 = vadd.f32 %v316, %v849
    %v851 = vtanh.pop %v850
    %v853 = vrot.slane %v851, 2
    %v855 = vsub.f32 %v611, %v853
    %v857 = vrot.slane %v855, 6
    %v859 = vmul.f32 %v845, %v857
    %v860 = vadd.f32 %v851, %v859
    %v862 = vrot.slane %v860, 4
    %v863 = vsel %vm363, %v862, 0
    %865 = vmatprep.subr.mxu0 0.0
    %866 = vmatpush1.msra.mxu0 0.0
    %867 = vmatprep.subr.mxu0 0.0
    %868 = vmatpush1.msra.mxu0 0.0
    %869 = vmatprep.subr.mxu0 0.0
    %870 = vmatpush1.msra.mxu0 0.0
    %871 = vmatprep.subr.mxu0 0.0
    %872 = vmatpush1.msra.mxu0 0.0
    %873 = vmatprep.subr.mxu0 0.0
    %874 = vmatpush1.msra.mxu0 0.0
    %875 = vmatprep.subr.mxu0 0.0
    %876 = vmatpush1.msra.mxu0 0.0
    %877 = vmatprep.subr.mxu0 0.0
    %878 = vmatpush1.msra.mxu0 0.0
    %879 = vmatprep.subr.mxu0 0.0
    %880 = vmatpush1.msra.mxu0 0.0
    %881 = vmatprep.subr.mxu0 0.0
    %882 = vmatpush1.msra.mxu0 0.0
    %883 = vmatprep.subr.mxu0 0.0
    %884 = vmatpush1.msra.mxu0 0.0
    %885 = vmatprep.subr.mxu0 0.0
    %886 = vmatpush1.msra.mxu0 0.0
    %887 = vmatprep.subr.mxu0 0.0
    %888 = vmatpush1.msra.mxu0 0.0
    %889 = vmatprep.subr.mxu0 0.0
    %890 = vmatpush1.msra.mxu0 %v327
    %891 = vmatprep.subr.mxu0 0.0
    %892 = vmatpush1.msra.mxu0 %v326
    %893 = vmatprep.subr.mxu0 0.0
    %894 = vmatpush1.msra.mxu0 %v325
    %895 = vmatprep.subr.mxu0 0.0
    %896 = vmatpush1.msra.mxu0 %v324
    %897 = vmatprep.subr.mxu0 0.0
    %898 = vmatpush2.msra.mxu0 0.0
    %899 = vmatprep.subr.mxu0 0.0
    %900 = vmatpush2.msra.mxu0 0.0
    %901 = vmatprep.subr.mxu0 0.0
    %902 = vmatpush2.msra.mxu0 0.0
    %903 = vmatprep.subr.mxu0 0.0
    %904 = vmatpush2.msra.mxu0 0.0
    %905 = vmatprep.subr.mxu0 0.0
    %906 = vmatpush2.msra.mxu0 0.0
    %907 = vmatprep.subr.mxu0 0.0
    %908 = vmatpush2.msra.mxu0 0.0
    %909 = vmatprep.subr.mxu0 0.0
    %910 = vmatpush2.msra.mxu0 0.0
    %911 = vmatprep.subr.mxu0 0.0
    %912 = vmatpush2.msra.mxu0 0.0
    %913 = vmatprep.subr.mxu0 0.0
    %914 = vmatpush2.msra.mxu0 0.0
    %915 = vmatprep.subr.mxu0 0.0
    %916 = vmatpush2.msra.mxu0 0.0
    %917 = vmatprep.subr.mxu0 0.0
    %918 = vmatpush2.msra.mxu0 0.0
    %919 = vmatprep.subr.mxu0 0.0
    %920 = vmatpush2.msra.mxu0 0.0
    %921 = vmatprep.subr.mxu0 0.0
    %922 = vmatpush2.msra.mxu0 0.0
    %923 = vmatprep.subr.mxu0 0.0
    %924 = vmatpush2.msra.mxu0 0.0
    %925 = vmatprep.subr.mxu0 0.0
    %926 = vmatpush2.msra.mxu0 0.0
    %927 = vmatprep.subr.mxu0 0.0
    %928 = vmatpush2.msra.mxu0 0.0
    %929 = vmatprep.mubr.f32.mxu0 0.0
    %930 = vmatmul.mubr.f32.gmra.mxu0 %v863
    %v931 = vpop.f32.mrf.mxu0
    %v932 = vadd.f32 0.0, %v931
    %v933 = vpop.f32.mrf.mxu0
    %934 = vdwg.mxu0
    %935 = vmatprep.subr.mxu0 0.0
    %936 = vmatpush1.msra.mxu0 0.0
    %937 = vmatprep.subr.mxu0 0.0
    %938 = vmatpush1.msra.mxu0 0.0
    %939 = vmatprep.subr.mxu0 0.0
    %940 = vmatpush1.msra.mxu0 0.0
    %941 = vmatprep.subr.mxu0 0.0
    %942 = vmatpush1.msra.mxu0 0.0
    %943 = vmatprep.subr.mxu0 0.0
    %944 = vmatpush1.msra.mxu0 0.0
    %945 = vmatprep.subr.mxu0 0.0
    %946 = vmatpush1.msra.mxu0 0.0
    %947 = vmatprep.subr.mxu0 0.0
    %948 = vmatpush1.msra.mxu0 0.0
    %949 = vmatprep.subr.mxu0 0.0
    %950 = vmatpush1.msra.mxu0 0.0
    %951 = vmatprep.subr.mxu0 0.0
    %952 = vmatpush1.msra.mxu0 0.0
    %953 = vmatprep.subr.mxu0 0.0
    %954 = vmatpush1.msra.mxu0 0.0
    %955 = vmatprep.subr.mxu0 0.0
    %956 = vmatpush1.msra.mxu0 0.0
    %957 = vmatprep.subr.mxu0 0.0
    %958 = vmatpush1.msra.mxu0 0.0
    %959 = vmatprep.subr.mxu0 0.0
    %960 = vmatpush1.msra.mxu0 %v332
    %961 = vmatprep.subr.mxu0 0.0
    %962 = vmatpush1.msra.mxu0 %v331
    %963 = vmatprep.subr.mxu0 0.0
    %964 = vmatpush1.msra.mxu0 %v330
    %965 = vmatprep.subr.mxu0 0.0
    %966 = vmatpush1.msra.mxu0 %v329
    %967 = vmatprep.subr.mxu0 0.0
    %968 = vmatpush2.msra.mxu0 0.0
    %969 = vmatprep.subr.mxu0 0.0
    %970 = vmatpush2.msra.mxu0 0.0
    %971 = vmatprep.subr.mxu0 0.0
    %972 = vmatpush2.msra.mxu0 0.0
    %973 = vmatprep.subr.mxu0 0.0
    %974 = vmatpush2.msra.mxu0 0.0
    %975 = vmatprep.subr.mxu0 0.0
    %976 = vmatpush2.msra.mxu0 0.0
    %977 = vmatprep.subr.mxu0 0.0
    %978 = vmatpush2.msra.mxu0 0.0
    %979 = vmatprep.subr.mxu0 0.0
    %980 = vmatpush2.msra.mxu0 0.0
    %981 = vmatprep.subr.mxu0 0.0
    %982 = vmatpush2.msra.mxu0 0.0
    %983 = vmatprep.subr.mxu0 0.0
    %984 = vmatpush2.msra.mxu0 0.0
    %985 = vmatprep.subr.mxu0 0.0
    %986 = vmatpush2.msra.mxu0 0.0
    %987 = vmatprep.subr.mxu0 0.0
    %988 = vmatpush2.msra.mxu0 0.0
    %989 = vmatprep.subr.mxu0 0.0
    %990 = vmatpush2.msra.mxu0 0.0
    %991 = vmatprep.subr.mxu0 0.0
    %992 = vmatpush2.msra.mxu0 0.0
    %993 = vmatprep.subr.mxu0 0.0
    %994 = vmatpush2.msra.mxu0 0.0
    %995 = vmatprep.subr.mxu0 0.0
    %996 = vmatpush2.msra.mxu0 0.0
    %997 = vmatprep.subr.mxu0 0.0
    %998 = vmatpush2.msra.mxu0 0.0
    %999 = vmatprep.mubr.f32.mxu0 0.0
    %1000 = vmatmul.mubr.f32.gmra.mxu0 %v863
    %v1001 = vpop.f32.mrf.mxu0
    %v1002 = vadd.f32 0.0, %v1001
    %v1003 = vpop.f32.mrf.mxu0
    %1004 = vdwg.mxu0
    %1005 = vmatprep.subr.mxu0 0.0
    %1006 = vmatpush1.msra.mxu0 0.0
    %1007 = vmatprep.subr.mxu0 0.0
    %1008 = vmatpush1.msra.mxu0 0.0
    %1009 = vmatprep.subr.mxu0 0.0
    %1010 = vmatpush1.msra.mxu0 0.0
    %1011 = vmatprep.subr.mxu0 0.0
    %1012 = vmatpush1.msra.mxu0 0.0
    %1013 = vmatprep.subr.mxu0 0.0
    %1014 = vmatpush1.msra.mxu0 0.0
    %1015 = vmatprep.subr.mxu0 0.0
    %1016 = vmatpush1.msra.mxu0 0.0
    %1017 = vmatprep.subr.mxu0 0.0
    %1018 = vmatpush1.msra.mxu0 0.0
    %1019 = vmatprep.subr.mxu0 0.0
    %1020 = vmatpush1.msra.mxu0 0.0
    %1021 = vmatprep.subr.mxu0 0.0
    %1022 = vmatpush1.msra.mxu0 0.0
    %1023 = vmatprep.subr.mxu0 0.0
    %1024 = vmatpush1.msra.mxu0 0.0
    %1025 = vmatprep.subr.mxu0 0.0
    %1026 = vmatpush1.msra.mxu0 0.0
    %1027 = vmatprep.subr.mxu0 0.0
    %1028 = vmatpush1.msra.mxu0 0.0
    %1029 = vmatprep.subr.mxu0 0.0
    %1030 = vmatpush1.msra.mxu0 %v337
    %1031 = vmatprep.subr.mxu0 0.0
    %1032 = vmatpush1.msra.mxu0 %v336
    %1033 = vmatprep.subr.mxu0 0.0
    %1034 = vmatpush1.msra.mxu0 %v335
    %1035 = vmatprep.subr.mxu0 0.0
    %1036 = vmatpush1.msra.mxu0 %v334
    %1037 = vmatprep.subr.mxu0 0.0
    %1038 = vmatpush2.msra.mxu0 0.0
    %1039 = vmatprep.subr.mxu0 0.0
    %1040 = vmatpush2.msra.mxu0 0.0
    %1041 = vmatprep.subr.mxu0 0.0
    %1042 = vmatpush2.msra.mxu0 0.0
    %1043 = vmatprep.subr.mxu0 0.0
    %1044 = vmatpush2.msra.mxu0 0.0
    %1045 = vmatprep.subr.mxu0 0.0
    %1046 = vmatpush2.msra.mxu0 0.0
    %1047 = vmatprep.subr.mxu0 0.0
    %1048 = vmatpush2.msra.mxu0 0.0
    %1049 = vmatprep.subr.mxu0 0.0
    %1050 = vmatpush2.msra.mxu0 0.0
    %1051 = vmatprep.subr.mxu0 0.0
    %1052 = vmatpush2.msra.mxu0 0.0
    %1053 = vmatprep.subr.mxu0 0.0
    %1054 = vmatpush2.msra.mxu0 0.0
    %1055 = vmatprep.subr.mxu0 0.0
    %1056 = vmatpush2.msra.mxu0 0.0
    %1057 = vmatprep.subr.mxu0 0.0
    %1058 = vmatpush2.msra.mxu0 0.0
    %1059 = vmatprep.subr.mxu0 0.0
    %1060 = vmatpush2.msra.mxu0 0.0
    %1061 = vmatprep.subr.mxu0 0.0
    %1062 = vmatpush2.msra.mxu0 0.0
    %1063 = vmatprep.subr.mxu0 0.0
    %1064 = vmatpush2.msra.mxu0 0.0
    %1065 = vmatprep.subr.mxu0 0.0
    %1066 = vmatpush2.msra.mxu0 0.0
    %1067 = vmatprep.subr.mxu0 0.0
    %1068 = vmatpush2.msra.mxu0 0.0
    %1069 = vmatprep.mubr.f32.mxu0 0.0
    %1070 = vmatmul.mubr.f32.gmra.mxu0 %v863
    %v1071 = vpop.f32.mrf.mxu0
    %v1072 = vadd.f32 %v356, %v1071
    %v1073 = vpop.f32.mrf.mxu0
    %1074 = vdwg.mxu0
    %v1076 = vrot.slane %v932, 2
    %v1078 = vadd.f32 %v137, %v1076
    %v1079 = vxor.u32 %v1078, 2147483648
    %v1080 = vmul.f32 %v1079, 1.442695
    %v1081 = vpow.pop %v1080
    %v1082 = vadd.f32 %v1081, 1.0
    %v1083 = vrcp.pop %v1082
    %v1084 = vmul.f32 1.0, %v1083
    %v1086 = vrot.slane %v1002, 2
    %v1088 = vadd.f32 %v228, %v1086
    %v1089 = vxor.u32 %v1088, 2147483648
    %v1090 = vmul.f32 %v1089, 1.442695
    %v1091 = vpow.pop %v1090
    %v1092 = vadd.f32 %v1091, 1.0
    %v1093 = vrcp.pop %v1092
    %v1094 = vmul.f32 1.0, %v1093
    %v1096 = vrot.slane %v1072, 2
    %v1098 = vmul.f32 %v1084, %v1096
    %v1099 = vadd.f32 %v316, %v1098
    %v1100 = vtanh.pop %v1099
    %v1102 = vrot.slane %v1100, 2
    %v1104 = vsub.f32 %v860, %v1102
    %v1106 = vrot.slane %v1104, 6
    %v1108 = vmul.f32 %v1094, %v1106
    %v1109 = vadd.f32 %v1100, %v1108
    %v1111 = vrot.slane %v1109, 6
    %v1112 = vsel %vm363, %v1111, 0
    %1114 = vmatprep.subr.mxu0 0.0
    %1115 = vmatpush1.msra.mxu0 0.0
    %1116 = vmatprep.subr.mxu0 0.0
    %1117 = vmatpush1.msra.mxu0 0.0
    %1118 = vmatprep.subr.mxu0 0.0
    %1119 = vmatpush1.msra.mxu0 0.0
    %1120 = vmatprep.subr.mxu0 0.0
    %1121 = vmatpush1.msra.mxu0 0.0
    %1122 = vmatprep.subr.mxu0 0.0
    %1123 = vmatpush1.msra.mxu0 0.0
    %1124 = vmatprep.subr.mxu0 0.0
    %1125 = vmatpush1.msra.mxu0 0.0
    %1126 = vmatprep.subr.mxu0 0.0
    %1127 = vmatpush1.msra.mxu0 0.0
    %1128 = vmatprep.subr.mxu0 0.0
    %1129 = vmatpush1.msra.mxu0 0.0
    %1130 = vmatprep.subr.mxu0 0.0
    %1131 = vmatpush1.msra.mxu0 0.0
    %1132 = vmatprep.subr.mxu0 0.0
    %1133 = vmatpush1.msra.mxu0 0.0
    %1134 = vmatprep.subr.mxu0 0.0
    %1135 = vmatpush1.msra.mxu0 0.0
    %1136 = vmatprep.subr.mxu0 0.0
    %1137 = vmatpush1.msra.mxu0 0.0
    %1138 = vmatprep.subr.mxu0 0.0
    %1139 = vmatpush1.msra.mxu0 %v327
    %1140 = vmatprep.subr.mxu0 0.0
    %1141 = vmatpush1.msra.mxu0 %v326
    %1142 = vmatprep.subr.mxu0 0.0
    %1143 = vmatpush1.msra.mxu0 %v325
    %1144 = vmatprep.subr.mxu0 0.0
    %1145 = vmatpush1.msra.mxu0 %v324
    %1146 = vmatprep.subr.mxu0 0.0
    %1147 = vmatpush2.msra.mxu0 0.0
    %1148 = vmatprep.subr.mxu0 0.0
    %1149 = vmatpush2.msra.mxu0 0.0
    %1150 = vmatprep.subr.mxu0 0.0
    %1151 = vmatpush2.msra.mxu0 0.0
    %1152 = vmatprep.subr.mxu0 0.0
    %1153 = vmatpush2.msra.mxu0 0.0
    %1154 = vmatprep.subr.mxu0 0.0
    %1155 = vmatpush2.msra.mxu0 0.0
    %1156 = vmatprep.subr.mxu0 0.0
    %1157 = vmatpush2.msra.mxu0 0.0
    %1158 = vmatprep.subr.mxu0 0.0
    %1159 = vmatpush2.msra.mxu0 0.0
    %1160 = vmatprep.subr.mxu0 0.0
    %1161 = vmatpush2.msra.mxu0 0.0
    %1162 = vmatprep.subr.mxu0 0.0
    %1163 = vmatpush2.msra.mxu0 0.0
    %1164 = vmatprep.subr.mxu0 0.0
    %1165 = vmatpush2.msra.mxu0 0.0
    %1166 = vmatprep.subr.mxu0 0.0
    %1167 = vmatpush2.msra.mxu0 0.0
    %1168 = vmatprep.subr.mxu0 0.0
    %1169 = vmatpush2.msra.mxu0 0.0
    %1170 = vmatprep.subr.mxu0 0.0
    %1171 = vmatpush2.msra.mxu0 0.0
    %1172 = vmatprep.subr.mxu0 0.0
    %1173 = vmatpush2.msra.mxu0 0.0
    %1174 = vmatprep.subr.mxu0 0.0
    %1175 = vmatpush2.msra.mxu0 0.0
    %1176 = vmatprep.subr.mxu0 0.0
    %1177 = vmatpush2.msra.mxu0 0.0
    %1178 = vmatprep.mubr.f32.mxu0 0.0
    %1179 = vmatmul.mubr.f32.gmra.mxu0 %v1112
    %v1180 = vpop.f32.mrf.mxu0
    %v1181 = vadd.f32 0.0, %v1180
    %v1182 = vpop.f32.mrf.mxu0
    %1183 = vdwg.mxu0
    %1184 = vmatprep.subr.mxu0 0.0
    %1185 = vmatpush1.msra.mxu0 0.0
    %1186 = vmatprep.subr.mxu0 0.0
    %1187 = vmatpush1.msra.mxu0 0.0
    %1188 = vmatprep.subr.mxu0 0.0
    %1189 = vmatpush1.msra.mxu0 0.0
    %1190 = vmatprep.subr.mxu0 0.0
    %1191 = vmatpush1.msra.mxu0 0.0
    %1192 = vmatprep.subr.mxu0 0.0
    %1193 = vmatpush1.msra.mxu0 0.0
    %1194 = vmatprep.subr.mxu0 0.0
    %1195 = vmatpush1.msra.mxu0 0.0
    %1196 = vmatprep.subr.mxu0 0.0
    %1197 = vmatpush1.msra.mxu0 0.0
    %1198 = vmatprep.subr.mxu0 0.0
    %1199 = vmatpush1.msra.mxu0 0.0
    %1200 = vmatprep.subr.mxu0 0.0
    %1201 = vmatpush1.msra.mxu0 0.0
    %1202 = vmatprep.subr.mxu0 0.0
    %1203 = vmatpush1.msra.mxu0 0.0
    %1204 = vmatprep.subr.mxu0 0.0
    %1205 = vmatpush1.msra.mxu0 0.0
    %1206 = vmatprep.subr.mxu0 0.0
    %1207 = vmatpush1.msra.mxu0 0.0
    %1208 = vmatprep.subr.mxu0 0.0
    %1209 = vmatpush1.msra.mxu0 %v332
    %1210 = vmatprep.subr.mxu0 0.0
    %1211 = vmatpush1.msra.mxu0 %v331
    %1212 = vmatprep.subr.mxu0 0.0
    %1213 = vmatpush1.msra.mxu0 %v330
    %1214 = vmatprep.subr.mxu0 0.0
    %1215 = vmatpush1.msra.mxu0 %v329
    %1216 = vmatprep.subr.mxu0 0.0
    %1217 = vmatpush2.msra.mxu0 0.0
    %1218 = vmatprep.subr.mxu0 0.0
    %1219 = vmatpush2.msra.mxu0 0.0
    %1220 = vmatprep.subr.mxu0 0.0
    %1221 = vmatpush2.msra.mxu0 0.0
    %1222 = vmatprep.subr.mxu0 0.0
    %1223 = vmatpush2.msra.mxu0 0.0
    %1224 = vmatprep.subr.mxu0 0.0
    %1225 = vmatpush2.msra.mxu0 0.0
    %1226 = vmatprep.subr.mxu0 0.0
    %1227 = vmatpush2.msra.mxu0 0.0
    %1228 = vmatprep.subr.mxu0 0.0
    %1229 = vmatpush2.msra.mxu0 0.0
    %1230 = vmatprep.subr.mxu0 0.0
    %1231 = vmatpush2.msra.mxu0 0.0
    %1232 = vmatprep.subr.mxu0 0.0
    %1233 = vmatpush2.msra.mxu0 0.0
    %1234 = vmatprep.subr.mxu0 0.0
    %1235 = vmatpush2.msra.mxu0 0.0
    %1236 = vmatprep.subr.mxu0 0.0
    %1237 = vmatpush2.msra.mxu0 0.0
    %1238 = vmatprep.subr.mxu0 0.0
    %1239 = vmatpush2.msra.mxu0 0.0
    %1240 = vmatprep.subr.mxu0 0.0
    %1241 = vmatpush2.msra.mxu0 0.0
    %1242 = vmatprep.subr.mxu0 0.0
    %1243 = vmatpush2.msra.mxu0 0.0
    %1244 = vmatprep.subr.mxu0 0.0
    %1245 = vmatpush2.msra.mxu0 0.0
    %1246 = vmatprep.subr.mxu0 0.0
    %1247 = vmatpush2.msra.mxu0 0.0
    %1248 = vmatprep.mubr.f32.mxu0 0.0
    %1249 = vmatmul.mubr.f32.gmra.mxu0 %v1112
    %v1250 = vpop.f32.mrf.mxu0
    %v1251 = vadd.f32 0.0, %v1250
    %v1252 = vpop.f32.mrf.mxu0
    %1253 = vdwg.mxu0
    %1254 = vmatprep.subr.mxu0 0.0
    %1255 = vmatpush1.msra.mxu0 0.0
    %1256 = vmatprep.subr.mxu0 0.0
    %1257 = vmatpush1.msra.mxu0 0.0
    %1258 = vmatprep.subr.mxu0 0.0
    %1259 = vmatpush1.msra.mxu0 0.0
    %1260 = vmatprep.subr.mxu0 0.0
    %1261 = vmatpush1.msra.mxu0 0.0
    %1262 = vmatprep.subr.mxu0 0.0
    %1263 = vmatpush1.msra.mxu0 0.0
    %1264 = vmatprep.subr.mxu0 0.0
    %1265 = vmatpush1.msra.mxu0 0.0
    %1266 = vmatprep.subr.mxu0 0.0
    %1267 = vmatpush1.msra.mxu0 0.0
    %1268 = vmatprep.subr.mxu0 0.0
    %1269 = vmatpush1.msra.mxu0 0.0
    %1270 = vmatprep.subr.mxu0 0.0
    %1271 = vmatpush1.msra.mxu0 0.0
    %1272 = vmatprep.subr.mxu0 0.0
    %1273 = vmatpush1.msra.mxu0 0.0
    %1274 = vmatprep.subr.mxu0 0.0
    %1275 = vmatpush1.msra.mxu0 0.0
    %1276 = vmatprep.subr.mxu0 0.0
    %1277 = vmatpush1.msra.mxu0 0.0
    %1278 = vmatprep.subr.mxu0 0.0
    %1279 = vmatpush1.msra.mxu0 %v337
    %1280 = vmatprep.subr.mxu0 0.0
    %1281 = vmatpush1.msra.mxu0 %v336
    %1282 = vmatprep.subr.mxu0 0.0
    %1283 = vmatpush1.msra.mxu0 %v335
    %1284 = vmatprep.subr.mxu0 0.0
    %1285 = vmatpush1.msra.mxu0 %v334
    %1286 = vmatprep.subr.mxu0 0.0
    %1287 = vmatpush2.msra.mxu0 0.0
    %1288 = vmatprep.subr.mxu0 0.0
    %1289 = vmatpush2.msra.mxu0 0.0
    %1290 = vmatprep.subr.mxu0 0.0
    %1291 = vmatpush2.msra.mxu0 0.0
    %1292 = vmatprep.subr.mxu0 0.0
    %1293 = vmatpush2.msra.mxu0 0.0
    %1294 = vmatprep.subr.mxu0 0.0
    %1295 = vmatpush2.msra.mxu0 0.0
    %1296 = vmatprep.subr.mxu0 0.0
    %1297 = vmatpush2.msra.mxu0 0.0
    %1298 = vmatprep.subr.mxu0 0.0
    %1299 = vmatpush2.msra.mxu0 0.0
    %1300 = vmatprep.subr.mxu0 0.0
    %1301 = vmatpush2.msra.mxu0 0.0
    %1302 = vmatprep.subr.mxu0 0.0
    %1303 = vmatpush2.msra.mxu0 0.0
    %1304 = vmatprep.subr.mxu0 0.0
    %1305 = vmatpush2.msra.mxu0 0.0
    %1306 = vmatprep.subr.mxu0 0.0
    %1307 = vmatpush2.msra.mxu0 0.0
    %1308 = vmatprep.subr.mxu0 0.0
    %1309 = vmatpush2.msra.mxu0 0.0
    %1310 = vmatprep.subr.mxu0 0.0
    %1311 = vmatpush2.msra.mxu0 0.0
    %1312 = vmatprep.subr.mxu0 0.0
    %1313 = vmatpush2.msra.mxu0 0.0
    %1314 = vmatprep.subr.mxu0 0.0
    %1315 = vmatpush2.msra.mxu0 0.0
    %1316 = vmatprep.subr.mxu0 0.0
    %1317 = vmatpush2.msra.mxu0 0.0
    %1318 = vmatprep.mubr.f32.mxu0 0.0
    %1319 = vmatmul.mubr.f32.gmra.mxu0 %v1112
    %v1320 = vpop.f32.mrf.mxu0
    %v1321 = vadd.f32 %v356, %v1320
    %v1322 = vpop.f32.mrf.mxu0
    %1323 = vdwg.mxu0
    %v1324 = vadd.f32 %v142, %v1181
    %v1325 = vxor.u32 %v1324, 2147483648
    %v1326 = vmul.f32 %v1325, 1.442695
    %v1327 = vpow.pop %v1326
    %v1328 = vadd.f32 %v1327, 1.0
    %v1329 = vrcp.pop %v1328
    %v1330 = vmul.f32 1.0, %v1329
    %v1331 = vadd.f32 %v233, %v1251
    %v1332 = vxor.u32 %v1331, 2147483648
    %v1333 = vmul.f32 %v1332, 1.442695
    %v1334 = vpow.pop %v1333
    %v1335 = vadd.f32 %v1334, 1.0
    %v1336 = vrcp.pop %v1335
    %v1337 = vmul.f32 1.0, %v1336
    %v1338 = vmul.f32 %v1330, %v1321
    %v1339 = vadd.f32 %v321, %v1338
    %v1340 = vtanh.pop %v1339
    %v1342 = vrot.slane %v1340, 2
    %v1344 = vsub.f32 %v1109, %v1342
    %v1346 = vrot.slane %v1344, 6
    %v1348 = vmul.f32 %v1337, %v1346
    %v1349 = vadd.f32 %v1340, %v1348
    %v1351 = vsel %vm363, %v1349, 0
    %1353 = vmatprep.subr.mxu0 0.0
    %1354 = vmatpush1.msra.mxu0 0.0
    %1355 = vmatprep.subr.mxu0 0.0
    %1356 = vmatpush1.msra.mxu0 0.0
    %1357 = vmatprep.subr.mxu0 0.0
    %1358 = vmatpush1.msra.mxu0 0.0
    %1359 = vmatprep.subr.mxu0 0.0
    %1360 = vmatpush1.msra.mxu0 0.0
    %1361 = vmatprep.subr.mxu0 0.0
    %1362 = vmatpush1.msra.mxu0 0.0
    %1363 = vmatprep.subr.mxu0 0.0
    %1364 = vmatpush1.msra.mxu0 0.0
    %1365 = vmatprep.subr.mxu0 0.0
    %1366 = vmatpush1.msra.mxu0 0.0
    %1367 = vmatprep.subr.mxu0 0.0
    %1368 = vmatpush1.msra.mxu0 0.0
    %1369 = vmatprep.subr.mxu0 0.0
    %1370 = vmatpush1.msra.mxu0 0.0
    %1371 = vmatprep.subr.mxu0 0.0
    %1372 = vmatpush1.msra.mxu0 0.0
    %1373 = vmatprep.subr.mxu0 0.0
    %1374 = vmatpush1.msra.mxu0 0.0
    %1375 = vmatprep.subr.mxu0 0.0
    %1376 = vmatpush1.msra.mxu0 0.0
    %1377 = vmatprep.subr.mxu0 0.0
    %1378 = vmatpush1.msra.mxu0 %v327
    %1379 = vmatprep.subr.mxu0 0.0
    %1380 = vmatpush1.msra.mxu0 %v326
    %1381 = vmatprep.subr.mxu0 0.0
    %1382 = vmatpush1.msra.mxu0 %v325
    %1383 = vmatprep.subr.mxu0 0.0
    %1384 = vmatpush1.msra.mxu0 %v324
    %1385 = vmatprep.subr.mxu0 0.0
    %1386 = vmatpush2.msra.mxu0 0.0
    %1387 = vmatprep.subr.mxu0 0.0
    %1388 = vmatpush2.msra.mxu0 0.0
    %1389 = vmatprep.subr.mxu0 0.0
    %1390 = vmatpush2.msra.mxu0 0.0
    %1391 = vmatprep.subr.mxu0 0.0
    %1392 = vmatpush2.msra.mxu0 0.0
    %1393 = vmatprep.subr.mxu0 0.0
    %1394 = vmatpush2.msra.mxu0 0.0
    %1395 = vmatprep.subr.mxu0 0.0
    %1396 = vmatpush2.msra.mxu0 0.0
    %1397 = vmatprep.subr.mxu0 0.0
    %1398 = vmatpush2.msra.mxu0 0.0
    %1399 = vmatprep.subr.mxu0 0.0
    %1400 = vmatpush2.msra.mxu0 0.0
    %1401 = vmatprep.subr.mxu0 0.0
    %1402 = vmatpush2.msra.mxu0 0.0
    %1403 = vmatprep.subr.mxu0 0.0
    %1404 = vmatpush2.msra.mxu0 0.0
    %1405 = vmatprep.subr.mxu0 0.0
    %1406 = vmatpush2.msra.mxu0 0.0
    %1407 = vmatprep.subr.mxu0 0.0
    %1408 = vmatpush2.msra.mxu0 0.0
    %1409 = vmatprep.subr.mxu0 0.0
    %1410 = vmatpush2.msra.mxu0 0.0
    %1411 = vmatprep.subr.mxu0 0.0
    %1412 = vmatpush2.msra.mxu0 0.0
    %1413 = vmatprep.subr.mxu0 0.0
    %1414 = vmatpush2.msra.mxu0 0.0
    %1415 = vmatprep.subr.mxu0 0.0
    %1416 = vmatpush2.msra.mxu0 0.0
    %1417 = vmatprep.mubr.f32.mxu0 0.0
    %1418 = vmatmul.mubr.f32.gmra.mxu0 %v1351
    %v1419 = vpop.f32.mrf.mxu0
    %v1420 = vadd.f32 0.0, %v1419
    %v1421 = vpop.f32.mrf.mxu0
    %1422 = vdwg.mxu0
    %1423 = vmatprep.subr.mxu0 0.0
    %1424 = vmatpush1.msra.mxu0 0.0
    %1425 = vmatprep.subr.mxu0 0.0
    %1426 = vmatpush1.msra.mxu0 0.0
    %1427 = vmatprep.subr.mxu0 0.0
    %1428 = vmatpush1.msra.mxu0 0.0
    %1429 = vmatprep.subr.mxu0 0.0
    %1430 = vmatpush1.msra.mxu0 0.0
    %1431 = vmatprep.subr.mxu0 0.0
    %1432 = vmatpush1.msra.mxu0 0.0
    %1433 = vmatprep.subr.mxu0 0.0
    %1434 = vmatpush1.msra.mxu0 0.0
    %1435 = vmatprep.subr.mxu0 0.0
    %1436 = vmatpush1.msra.mxu0 0.0
    %1437 = vmatprep.subr.mxu0 0.0
    %1438 = vmatpush1.msra.mxu0 0.0
    %1439 = vmatprep.subr.mxu0 0.0
    %1440 = vmatpush1.msra.mxu0 0.0
    %1441 = vmatprep.subr.mxu0 0.0
    %1442 = vmatpush1.msra.mxu0 0.0
    %1443 = vmatprep.subr.mxu0 0.0
    %1444 = vmatpush1.msra.mxu0 0.0
    %1445 = vmatprep.subr.mxu0 0.0
    %1446 = vmatpush1.msra.mxu0 0.0
    %1447 = vmatprep.subr.mxu0 0.0
    %1448 = vmatpush1.msra.mxu0 %v332
    %1449 = vmatprep.subr.mxu0 0.0
    %1450 = vmatpush1.msra.mxu0 %v331
    %1451 = vmatprep.subr.mxu0 0.0
    %1452 = vmatpush1.msra.mxu0 %v330
    %1453 = vmatprep.subr.mxu0 0.0
    %1454 = vmatpush1.msra.mxu0 %v329
    %1455 = vmatprep.subr.mxu0 0.0
    %1456 = vmatpush2.msra.mxu0 0.0
    %1457 = vmatprep.subr.mxu0 0.0
    %1458 = vmatpush2.msra.mxu0 0.0
    %1459 = vmatprep.subr.mxu0 0.0
    %1460 = vmatpush2.msra.mxu0 0.0
    %1461 = vmatprep.subr.mxu0 0.0
    %1462 = vmatpush2.msra.mxu0 0.0
    %1463 = vmatprep.subr.mxu0 0.0
    %1464 = vmatpush2.msra.mxu0 0.0
    %1465 = vmatprep.subr.mxu0 0.0
    %1466 = vmatpush2.msra.mxu0 0.0
    %1467 = vmatprep.subr.mxu0 0.0
    %1468 = vmatpush2.msra.mxu0 0.0
    %1469 = vmatprep.subr.mxu0 0.0
    %1470 = vmatpush2.msra.mxu0 0.0
    %1471 = vmatprep.subr.mxu0 0.0
    %1472 = vmatpush2.msra.mxu0 0.0
    %1473 = vmatprep.subr.mxu0 0.0
    %1474 = vmatpush2.msra.mxu0 0.0
    %1475 = vmatprep.subr.mxu0 0.0
    %1476 = vmatpush2.msra.mxu0 0.0
    %1477 = vmatprep.subr.mxu0 0.0
    %1478 = vmatpush2.msra.mxu0 0.0
    %1479 = vmatprep.subr.mxu0 0.0
    %1480 = vmatpush2.msra.mxu0 0.0
    %1481 = vmatprep.subr.mxu0 0.0
    %1482 = vmatpush2.msra.mxu0 0.0
    %1483 = vmatprep.subr.mxu0 0.0
    %1484 = vmatpush2.msra.mxu0 0.0
    %1485 = vmatprep.subr.mxu0 0.0
    %1486 = vmatpush2.msra.mxu0 0.0
    %1487 = vmatprep.mubr.f32.mxu0 0.0
    %1488 = vmatmul.mubr.f32.gmra.mxu0 %v1351
    %v1489 = vpop.f32.mrf.mxu0
    %v1490 = vadd.f32 0.0, %v1489
    %v1491 = vpop.f32.mrf.mxu0
    %1492 = vdwg.mxu0
    %1493 = vmatprep.subr.mxu0 0.0
    %1494 = vmatpush1.msra.mxu0 0.0
    %1495 = vmatprep.subr.mxu0 0.0
    %1496 = vmatpush1.msra.mxu0 0.0
    %1497 = vmatprep.subr.mxu0 0.0
    %1498 = vmatpush1.msra.mxu0 0.0
    %1499 = vmatprep.subr.mxu0 0.0
    %1500 = vmatpush1.msra.mxu0 0.0
    %1501 = vmatprep.subr.mxu0 0.0
    %1502 = vmatpush1.msra.mxu0 0.0
    %1503 = vmatprep.subr.mxu0 0.0
    %1504 = vmatpush1.msra.mxu0 0.0
    %1505 = vmatprep.subr.mxu0 0.0
    %1506 = vmatpush1.msra.mxu0 0.0
    %1507 = vmatprep.subr.mxu0 0.0
    %1508 = vmatpush1.msra.mxu0 0.0
    %1509 = vmatprep.subr.mxu0 0.0
    %1510 = vmatpush1.msra.mxu0 0.0
    %1511 = vmatprep.subr.mxu0 0.0
    %1512 = vmatpush1.msra.mxu0 0.0
    %1513 = vmatprep.subr.mxu0 0.0
    %1514 = vmatpush1.msra.mxu0 0.0
    %1515 = vmatprep.subr.mxu0 0.0
    %1516 = vmatpush1.msra.mxu0 0.0
    %1517 = vmatprep.subr.mxu0 0.0
    %1518 = vmatpush1.msra.mxu0 %v337
    %1519 = vmatprep.subr.mxu0 0.0
    %1520 = vmatpush1.msra.mxu0 %v336
    %1521 = vmatprep.subr.mxu0 0.0
    %1522 = vmatpush1.msra.mxu0 %v335
    %1523 = vmatprep.subr.mxu0 0.0
    %1524 = vmatpush1.msra.mxu0 %v334
    %1525 = vmatprep.subr.mxu0 0.0
    %1526 = vmatpush2.msra.mxu0 0.0
    %1527 = vmatprep.subr.mxu0 0.0
    %1528 = vmatpush2.msra.mxu0 0.0
    %1529 = vmatprep.subr.mxu0 0.0
    %1530 = vmatpush2.msra.mxu0 0.0
    %1531 = vmatprep.subr.mxu0 0.0
    %1532 = vmatpush2.msra.mxu0 0.0
    %1533 = vmatprep.subr.mxu0 0.0
    %1534 = vmatpush2.msra.mxu0 0.0
    %1535 = vmatprep.subr.mxu0 0.0
    %1536 = vmatpush2.msra.mxu0 0.0
    %1537 = vmatprep.subr.mxu0 0.0
    %1538 = vmatpush2.msra.mxu0 0.0
    %1539 = vmatprep.subr.mxu0 0.0
    %1540 = vmatpush2.msra.mxu0 0.0
    %1541 = vmatprep.subr.mxu0 0.0
    %1542 = vmatpush2.msra.mxu0 0.0
    %1543 = vmatprep.subr.mxu0 0.0
    %1544 = vmatpush2.msra.mxu0 0.0
    %1545 = vmatprep.subr.mxu0 0.0
    %1546 = vmatpush2.msra.mxu0 0.0
    %1547 = vmatprep.subr.mxu0 0.0
    %1548 = vmatpush2.msra.mxu0 0.0
    %1549 = vmatprep.subr.mxu0 0.0
    %1550 = vmatpush2.msra.mxu0 0.0
    %1551 = vmatprep.subr.mxu0 0.0
    %1552 = vmatpush2.msra.mxu0 0.0
    %1553 = vmatprep.subr.mxu0 0.0
    %1554 = vmatpush2.msra.mxu0 0.0
    %1555 = vmatprep.subr.mxu0 0.0
    %1556 = vmatpush2.msra.mxu0 0.0
    %1557 = vmatprep.mubr.f32.mxu0 0.0
    %1558 = vmatmul.mubr.f32.gmra.mxu0 %v1351
    %v1559 = vpop.f32.mrf.mxu0
    %v1560 = vadd.f32 %v356, %v1559
    %v1561 = vpop.f32.mrf.mxu0
    %1562 = vdwg.mxu0
    %v1564 = vrot.slane %v1420, 6
    %v1566 = vadd.f32 %v142, %v1564
    %v1567 = vxor.u32 %v1566, 2147483648
    %v1568 = vmul.f32 %v1567, 1.442695
    %v1569 = vpow.pop %v1568
    %v1570 = vadd.f32 %v1569, 1.0
    %v1571 = vrcp.pop %v1570
    %v1572 = vmul.f32 1.0, %v1571
    %v1574 = vrot.slane %v1490, 6
    %v1576 = vadd.f32 %v233, %v1574
    %v1577 = vxor.u32 %v1576, 2147483648
    %v1578 = vmul.f32 %v1577, 1.442695
    %v1579 = vpow.pop %v1578
    %v1580 = vadd.f32 %v1579, 1.0
    %v1581 = vrcp.pop %v1580
    %v1582 = vmul.f32 1.0, %v1581
    %v1584 = vrot.slane %v1560, 6
    %v1586 = vmul.f32 %v1572, %v1584
    %v1587 = vadd.f32 %v321, %v1586
    %v1588 = vtanh.pop %v1587
    %v1590 = vrot.slane %v1588, 2
    %v1592 = vsub.f32 %v1349, %v1590
    %v1594 = vrot.slane %v1592, 6
    %v1596 = vmul.f32 %v1582, %v1594
    %v1597 = vadd.f32 %v1588, %v1596
    %v1599 = vrot.slane %v1597, 2
    %v1600 = vsel %vm363, %v1599, 0
    %1602 = vmatprep.subr.mxu0 0.0
    %1603 = vmatpush1.msra.mxu0 0.0
    %1604 = vmatprep.subr.mxu0 0.0
    %1605 = vmatpush1.msra.mxu0 0.0
    %1606 = vmatprep.subr.mxu0 0.0
    %1607 = vmatpush1.msra.mxu0 0.0
    %1608 = vmatprep.subr.mxu0 0.0
    %1609 = vmatpush1.msra.mxu0 0.0
    %1610 = vmatprep.subr.mxu0 0.0
    %1611 = vmatpush1.msra.mxu0 0.0
    %1612 = vmatprep.subr.mxu0 0.0
    %1613 = vmatpush1.msra.mxu0 0.0
    %1614 = vmatprep.subr.mxu0 0.0
    %1615 = vmatpush1.msra.mxu0 0.0
    %1616 = vmatprep.subr.mxu0 0.0
    %1617 = vmatpush1.msra.mxu0 0.0
    %1618 = vmatprep.subr.mxu0 0.0
    %1619 = vmatpush1.msra.mxu0 0.0
    %1620 = vmatprep.subr.mxu0 0.0
    %1621 = vmatpush1.msra.mxu0 0.0
    %1622 = vmatprep.subr.mxu0 0.0
    %1623 = vmatpush1.msra.mxu0 0.0
    %1624 = vmatprep.subr.mxu0 0.0
    %1625 = vmatpush1.msra.mxu0 0.0
    %1626 = vmatprep.subr.mxu0 0.0
    %1627 = vmatpush1.msra.mxu0 %v327
    %1628 = vmatprep.subr.mxu0 0.0
    %1629 = vmatpush1.msra.mxu0 %v326
    %1630 = vmatprep.subr.mxu0 0.0
    %1631 = vmatpush1.msra.mxu0 %v325
    %1632 = vmatprep.subr.mxu0 0.0
    %1633 = vmatpush1.msra.mxu0 %v324
    %1634 = vmatprep.subr.mxu0 0.0
    %1635 = vmatpush2.msra.mxu0 0.0
    %1636 = vmatprep.subr.mxu0 0.0
    %1637 = vmatpush2.msra.mxu0 0.0
    %1638 = vmatprep.subr.mxu0 0.0
    %1639 = vmatpush2.msra.mxu0 0.0
    %1640 = vmatprep.subr.mxu0 0.0
    %1641 = vmatpush2.msra.mxu0 0.0
    %1642 = vmatprep.subr.mxu0 0.0
    %1643 = vmatpush2.msra.mxu0 0.0
    %1644 = vmatprep.subr.mxu0 0.0
    %1645 = vmatpush2.msra.mxu0 0.0
    %1646 = vmatprep.subr.mxu0 0.0
    %1647 = vmatpush2.msra.mxu0 0.0
    %1648 = vmatprep.subr.mxu0 0.0
    %1649 = vmatpush2.msra.mxu0 0.0
    %1650 = vmatprep.subr.mxu0 0.0
    %1651 = vmatpush2.msra.mxu0 0.0
    %1652 = vmatprep.subr.mxu0 0.0
    %1653 = vmatpush2.msra.mxu0 0.0
    %1654 = vmatprep.subr.mxu0 0.0
    %1655 = vmatpush2.msra.mxu0 0.0
    %1656 = vmatprep.subr.mxu0 0.0
    %1657 = vmatpush2.msra.mxu0 0.0
    %1658 = vmatprep.subr.mxu0 0.0
    %1659 = vmatpush2.msra.mxu0 0.0
    %1660 = vmatprep.subr.mxu0 0.0
    %1661 = vmatpush2.msra.mxu0 0.0
    %1662 = vmatprep.subr.mxu0 0.0
    %1663 = vmatpush2.msra.mxu0 0.0
    %1664 = vmatprep.subr.mxu0 0.0
    %1665 = vmatpush2.msra.mxu0 0.0
    %1666 = vmatprep.mubr.f32.mxu0 0.0
    %1667 = vmatmul.mubr.f32.gmra.mxu0 %v1600
    %v1668 = vpop.f32.mrf.mxu0
    %v1669 = vadd.f32 0.0, %v1668
    %v1670 = vpop.f32.mrf.mxu0
    %1671 = vdwg.mxu0
    %1672 = vmatprep.subr.mxu0 0.0
    %1673 = vmatpush1.msra.mxu0 0.0
    %1674 = vmatprep.subr.mxu0 0.0
    %1675 = vmatpush1.msra.mxu0 0.0
    %1676 = vmatprep.subr.mxu0 0.0
    %1677 = vmatpush1.msra.mxu0 0.0
    %1678 = vmatprep.subr.mxu0 0.0
    %1679 = vmatpush1.msra.mxu0 0.0
    %1680 = vmatprep.subr.mxu0 0.0
    %1681 = vmatpush1.msra.mxu0 0.0
    %1682 = vmatprep.subr.mxu0 0.0
    %1683 = vmatpush1.msra.mxu0 0.0
    %1684 = vmatprep.subr.mxu0 0.0
    %1685 = vmatpush1.msra.mxu0 0.0
    %1686 = vmatprep.subr.mxu0 0.0
    %1687 = vmatpush1.msra.mxu0 0.0
    %1688 = vmatprep.subr.mxu0 0.0
    %1689 = vmatpush1.msra.mxu0 0.0
    %1690 = vmatprep.subr.mxu0 0.0
    %1691 = vmatpush1.msra.mxu0 0.0
    %1692 = vmatprep.subr.mxu0 0.0
    %1693 = vmatpush1.msra.mxu0 0.0
    %1694 = vmatprep.subr.mxu0 0.0
    %1695 = vmatpush1.msra.mxu0 0.0
    %1696 = vmatprep.subr.mxu0 0.0
    %1697 = vmatpush1.msra.mxu0 %v332
    %1698 = vmatprep.subr.mxu0 0.0
    %1699 = vmatpush1.msra.mxu0 %v331
    %1700 = vmatprep.subr.mxu0 0.0
    %1701 = vmatpush1.msra.mxu0 %v330
    %1702 = vmatprep.subr.mxu0 0.0
    %1703 = vmatpush1.msra.mxu0 %v329
    %1704 = vmatprep.subr.mxu0 0.0
    %1705 = vmatpush2.msra.mxu0 0.0
    %1706 = vmatprep.subr.mxu0 0.0
    %1707 = vmatpush2.msra.mxu0 0.0
    %1708 = vmatprep.subr.mxu0 0.0
    %1709 = vmatpush2.msra.mxu0 0.0
    %1710 = vmatprep.subr.mxu0 0.0
    %1711 = vmatpush2.msra.mxu0 0.0
    %1712 = vmatprep.subr.mxu0 0.0
    %1713 = vmatpush2.msra.mxu0 0.0
    %1714 = vmatprep.subr.mxu0 0.0
    %1715 = vmatpush2.msra.mxu0 0.0
    %1716 = vmatprep.subr.mxu0 0.0
    %1717 = vmatpush2.msra.mxu0 0.0
    %1718 = vmatprep.subr.mxu0 0.0
    %1719 = vmatpush2.msra.mxu0 0.0
    %1720 = vmatprep.subr.mxu0 0.0
    %1721 = vmatpush2.msra.mxu0 0.0
    %1722 = vmatprep.subr.mxu0 0.0
    %1723 = vmatpush2.msra.mxu0 0.0
    %1724 = vmatprep.subr.mxu0 0.0
    %1725 = vmatpush2.msra.mxu0 0.0
    %1726 = vmatprep.subr.mxu0 0.0
    %1727 = vmatpush2.msra.mxu0 0.0
    %1728 = vmatprep.subr.mxu0 0.0
    %1729 = vmatpush2.msra.mxu0 0.0
    %1730 = vmatprep.subr.mxu0 0.0
    %1731 = vmatpush2.msra.mxu0 0.0
    %1732 = vmatprep.subr.mxu0 0.0
    %1733 = vmatpush2.msra.mxu0 0.0
    %1734 = vmatprep.subr.mxu0 0.0
    %1735 = vmatpush2.msra.mxu0 0.0
    %1736 = vmatprep.mubr.f32.mxu0 0.0
    %1737 = vmatmul.mubr.f32.gmra.mxu0 %v1600
    %v1738 = vpop.f32.mrf.mxu0
    %v1739 = vadd.f32 0.0, %v1738
    %v1740 = vpop.f32.mrf.mxu0
    %1741 = vdwg.mxu0
    %1742 = vmatprep.subr.mxu0 0.0
    %1743 = vmatpush1.msra.mxu0 0.0
    %1744 = vmatprep.subr.mxu0 0.0
    %1745 = vmatpush1.msra.mxu0 0.0
    %1746 = vmatprep.subr.mxu0 0.0
    %1747 = vmatpush1.msra.mxu0 0.0
    %1748 = vmatprep.subr.mxu0 0.0
    %1749 = vmatpush1.msra.mxu0 0.0
    %1750 = vmatprep.subr.mxu0 0.0
    %1751 = vmatpush1.msra.mxu0 0.0
    %1752 = vmatprep.subr.mxu0 0.0
    %1753 = vmatpush1.msra.mxu0 0.0
    %1754 = vmatprep.subr.mxu0 0.0
    %1755 = vmatpush1.msra.mxu0 0.0
    %1756 = vmatprep.subr.mxu0 0.0
    %1757 = vmatpush1.msra.mxu0 0.0
    %1758 = vmatprep.subr.mxu0 0.0
    %1759 = vmatpush1.msra.mxu0 0.0
    %1760 = vmatprep.subr.mxu0 0.0
    %1761 = vmatpush1.msra.mxu0 0.0
    %1762 = vmatprep.subr.mxu0 0.0
    %1763 = vmatpush1.msra.mxu0 0.0
    %1764 = vmatprep.subr.mxu0 0.0
    %1765 = vmatpush1.msra.mxu0 0.0
    %1766 = vmatprep.subr.mxu0 0.0
    %1767 = vmatpush1.msra.mxu0 %v337
    %1768 = vmatprep.subr.mxu0 0.0
    %1769 = vmatpush1.msra.mxu0 %v336
    %1770 = vmatprep.subr.mxu0 0.0
    %1771 = vmatpush1.msra.mxu0 %v335
    %1772 = vmatprep.subr.mxu0 0.0
    %1773 = vmatpush1.msra.mxu0 %v334
    %1774 = vmatprep.subr.mxu0 0.0
    %1775 = vmatpush2.msra.mxu0 0.0
    %1776 = vmatprep.subr.mxu0 0.0
    %1777 = vmatpush2.msra.mxu0 0.0
    %1778 = vmatprep.subr.mxu0 0.0
    %1779 = vmatpush2.msra.mxu0 0.0
    %1780 = vmatprep.subr.mxu0 0.0
    %1781 = vmatpush2.msra.mxu0 0.0
    %1782 = vmatprep.subr.mxu0 0.0
    %1783 = vmatpush2.msra.mxu0 0.0
    %1784 = vmatprep.subr.mxu0 0.0
    %1785 = vmatpush2.msra.mxu0 0.0
    %1786 = vmatprep.subr.mxu0 0.0
    %1787 = vmatpush2.msra.mxu0 0.0
    %1788 = vmatprep.subr.mxu0 0.0
    %1789 = vmatpush2.msra.mxu0 0.0
    %1790 = vmatprep.subr.mxu0 0.0
    %1791 = vmatpush2.msra.mxu0 0.0
    %1792 = vmatprep.subr.mxu0 0.0
    %1793 = vmatpush2.msra.mxu0 0.0
    %1794 = vmatprep.subr.mxu0 0.0
    %1795 = vmatpush2.msra.mxu0 0.0
    %1796 = vmatprep.subr.mxu0 0.0
    %1797 = vmatpush2.msra.mxu0 0.0
    %1798 = vmatprep.subr.mxu0 0.0
    %1799 = vmatpush2.msra.mxu0 0.0
    %1800 = vmatprep.subr.mxu0 0.0
    %1801 = vmatpush2.msra.mxu0 0.0
    %1802 = vmatprep.subr.mxu0 0.0
    %1803 = vmatpush2.msra.mxu0 0.0
    %1804 = vmatprep.subr.mxu0 0.0
    %1805 = vmatpush2.msra.mxu0 0.0
    %1806 = vmatprep.mubr.f32.mxu0 0.0
    %1807 = vmatmul.mubr.f32.gmra.mxu0 %v1600
    %v1808 = vpop.f32.mrf.mxu0
    %v1809 = vadd.f32 %v356, %v1808
    %v1810 = vpop.f32.mrf.mxu0
    %1811 = vdwg.mxu0
    %v1813 = vrot.slane %v1669, 4
    %v1815 = vadd.f32 %v142, %v1813
    %v1816 = vxor.u32 %v1815, 2147483648
    %v1817 = vmul.f32 %v1816, 1.442695
    %v1818 = vpow.pop %v1817
    %v1819 = vadd.f32 %v1818, 1.0
    %v1820 = vrcp.pop %v1819
    %v1821 = vmul.f32 1.0, %v1820
    %v1823 = vrot.slane %v1739, 4
    %v1825 = vadd.f32 %v233, %v1823
    %v1826 = vxor.u32 %v1825, 2147483648
    %v1827 = vmul.f32 %v1826, 1.442695
    %v1828 = vpow.pop %v1827
    %v1829 = vadd.f32 %v1828, 1.0
    %v1830 = vrcp.pop %v1829
    %v1831 = vmul.f32 1.0, %v1830
    %v1833 = vrot.slane %v1809, 4
    %v1835 = vmul.f32 %v1821, %v1833
    %v1836 = vadd.f32 %v321, %v1835
    %v1837 = vtanh.pop %v1836
    %v1839 = vrot.slane %v1837, 2
    %v1841 = vsub.f32 %v1597, %v1839
    %v1843 = vrot.slane %v1841, 6
    %v1845 = vmul.f32 %v1831, %v1843
    %v1846 = vadd.f32 %v1837, %v1845
    %v1848 = vrot.slane %v1846, 4
    %v1849 = vsel %vm363, %v1848, 0
    %1851 = vmatprep.subr.mxu0 0.0
    %1852 = vmatpush1.msra.mxu0 0.0
    %1853 = vmatprep.subr.mxu0 0.0
    %1854 = vmatpush1.msra.mxu0 0.0
    %1855 = vmatprep.subr.mxu0 0.0
    %1856 = vmatpush1.msra.mxu0 0.0
    %1857 = vmatprep.subr.mxu0 0.0
    %1858 = vmatpush1.msra.mxu0 0.0
    %1859 = vmatprep.subr.mxu0 0.0
    %1860 = vmatpush1.msra.mxu0 0.0
    %1861 = vmatprep.subr.mxu0 0.0
    %1862 = vmatpush1.msra.mxu0 0.0
    %1863 = vmatprep.subr.mxu0 0.0
    %1864 = vmatpush1.msra.mxu0 0.0
    %1865 = vmatprep.subr.mxu0 0.0
    %1866 = vmatpush1.msra.mxu0 0.0
    %1867 = vmatprep.subr.mxu0 0.0
    %1868 = vmatpush1.msra.mxu0 0.0
    %1869 = vmatprep.subr.mxu0 0.0
    %1870 = vmatpush1.msra.mxu0 0.0
    %1871 = vmatprep.subr.mxu0 0.0
    %1872 = vmatpush1.msra.mxu0 0.0
    %1873 = vmatprep.subr.mxu0 0.0
    %1874 = vmatpush1.msra.mxu0 0.0
    %1875 = vmatprep.subr.mxu0 0.0
    %1876 = vmatpush1.msra.mxu0 %v327
    %1877 = vmatprep.subr.mxu0 0.0
    %1878 = vmatpush1.msra.mxu0 %v326
    %1879 = vmatprep.subr.mxu0 0.0
    %1880 = vmatpush1.msra.mxu0 %v325
    %1881 = vmatprep.subr.mxu0 0.0
    %1882 = vmatpush1.msra.mxu0 %v324
    %1883 = vmatprep.subr.mxu0 0.0
    %1884 = vmatpush2.msra.mxu0 0.0
    %1885 = vmatprep.subr.mxu0 0.0
    %1886 = vmatpush2.msra.mxu0 0.0
    %1887 = vmatprep.subr.mxu0 0.0
    %1888 = vmatpush2.msra.mxu0 0.0
    %1889 = vmatprep.subr.mxu0 0.0
    %1890 = vmatpush2.msra.mxu0 0.0
    %1891 = vmatprep.subr.mxu0 0.0
    %1892 = vmatpush2.msra.mxu0 0.0
    %1893 = vmatprep.subr.mxu0 0.0
    %1894 = vmatpush2.msra.mxu0 0.0
    %1895 = vmatprep.subr.mxu0 0.0
    %1896 = vmatpush2.msra.mxu0 0.0
    %1897 = vmatprep.subr.mxu0 0.0
    %1898 = vmatpush2.msra.mxu0 0.0
    %1899 = vmatprep.subr.mxu0 0.0
    %1900 = vmatpush2.msra.mxu0 0.0
    %1901 = vmatprep.subr.mxu0 0.0
    %1902 = vmatpush2.msra.mxu0 0.0
    %1903 = vmatprep.subr.mxu0 0.0
    %1904 = vmatpush2.msra.mxu0 0.0
    %1905 = vmatprep.subr.mxu0 0.0
    %1906 = vmatpush2.msra.mxu0 0.0
    %1907 = vmatprep.subr.mxu0 0.0
    %1908 = vmatpush2.msra.mxu0 0.0
    %1909 = vmatprep.subr.mxu0 0.0
    %1910 = vmatpush2.msra.mxu0 0.0
    %1911 = vmatprep.subr.mxu0 0.0
    %1912 = vmatpush2.msra.mxu0 0.0
    %1913 = vmatprep.subr.mxu0 0.0
    %1914 = vmatpush2.msra.mxu0 0.0
    %1915 = vmatprep.mubr.f32.mxu0 0.0
    %1916 = vmatmul.mubr.f32.gmra.mxu0 %v1849
    %v1917 = vpop.f32.mrf.mxu0
    %v1918 = vadd.f32 0.0, %v1917
    %v1919 = vpop.f32.mrf.mxu0
    %1920 = vdwg.mxu0
    %1921 = vmatprep.subr.mxu0 0.0
    %1922 = vmatpush1.msra.mxu0 0.0
    %1923 = vmatprep.subr.mxu0 0.0
    %1924 = vmatpush1.msra.mxu0 0.0
    %1925 = vmatprep.subr.mxu0 0.0
    %1926 = vmatpush1.msra.mxu0 0.0
    %1927 = vmatprep.subr.mxu0 0.0
    %1928 = vmatpush1.msra.mxu0 0.0
    %1929 = vmatprep.subr.mxu0 0.0
    %1930 = vmatpush1.msra.mxu0 0.0
    %1931 = vmatprep.subr.mxu0 0.0
    %1932 = vmatpush1.msra.mxu0 0.0
    %1933 = vmatprep.subr.mxu0 0.0
    %1934 = vmatpush1.msra.mxu0 0.0
    %1935 = vmatprep.subr.mxu0 0.0
    %1936 = vmatpush1.msra.mxu0 0.0
    %1937 = vmatprep.subr.mxu0 0.0
    %1938 = vmatpush1.msra.mxu0 0.0
    %1939 = vmatprep.subr.mxu0 0.0
    %1940 = vmatpush1.msra.mxu0 0.0
    %1941 = vmatprep.subr.mxu0 0.0
    %1942 = vmatpush1.msra.mxu0 0.0
    %1943 = vmatprep.subr.mxu0 0.0
    %1944 = vmatpush1.msra.mxu0 0.0
    %1945 = vmatprep.subr.mxu0 0.0
    %1946 = vmatpush1.msra.mxu0 %v332
    %1947 = vmatprep.subr.mxu0 0.0
    %1948 = vmatpush1.msra.mxu0 %v331
    %1949 = vmatprep.subr.mxu0 0.0
    %1950 = vmatpush1.msra.mxu0 %v330
    %1951 = vmatprep.subr.mxu0 0.0
    %1952 = vmatpush1.msra.mxu0 %v329
    %1953 = vmatprep.subr.mxu0 0.0
    %1954 = vmatpush2.msra.mxu0 0.0
    %1955 = vmatprep.subr.mxu0 0.0
    %1956 = vmatpush2.msra.mxu0 0.0
    %1957 = vmatprep.subr.mxu0 0.0
    %1958 = vmatpush2.msra.mxu0 0.0
    %1959 = vmatprep.subr.mxu0 0.0
    %1960 = vmatpush2.msra.mxu0 0.0
    %1961 = vmatprep.subr.mxu0 0.0
    %1962 = vmatpush2.msra.mxu0 0.0
    %1963 = vmatprep.subr.mxu0 0.0
    %1964 = vmatpush2.msra.mxu0 0.0
    %1965 = vmatprep.subr.mxu0 0.0
    %1966 = vmatpush2.msra.mxu0 0.0
    %1967 = vmatprep.subr.mxu0 0.0
    %1968 = vmatpush2.msra.mxu0 0.0
    %1969 = vmatprep.subr.mxu0 0.0
    %1970 = vmatpush2.msra.mxu0 0.0
    %1971 = vmatprep.subr.mxu0 0.0
    %1972 = vmatpush2.msra.mxu0 0.0
    %1973 = vmatprep.subr.mxu0 0.0
    %1974 = vmatpush2.msra.mxu0 0.0
    %1975 = vmatprep.subr.mxu0 0.0
    %1976 = vmatpush2.msra.mxu0 0.0
    %1977 = vmatprep.subr.mxu0 0.0
    %1978 = vmatpush2.msra.mxu0 0.0
    %1979 = vmatprep.subr.mxu0 0.0
    %1980 = vmatpush2.msra.mxu0 0.0
    %1981 = vmatprep.subr.mxu0 0.0
    %1982 = vmatpush2.msra.mxu0 0.0
    %1983 = vmatprep.subr.mxu0 0.0
    %1984 = vmatpush2.msra.mxu0 0.0
    %1985 = vmatprep.mubr.f32.mxu0 0.0
    %1986 = vmatmul.mubr.f32.gmra.mxu0 %v1849
    %v1987 = vpop.f32.mrf.mxu0
    %v1988 = vadd.f32 0.0, %v1987
    %v1989 = vpop.f32.mrf.mxu0
    %1990 = vdwg.mxu0
    %1991 = vmatprep.subr.mxu0 0.0
    %1992 = vmatpush1.msra.mxu0 0.0
    %1993 = vmatprep.subr.mxu0 0.0
    %1994 = vmatpush1.msra.mxu0 0.0
    %1995 = vmatprep.subr.mxu0 0.0
    %1996 = vmatpush1.msra.mxu0 0.0
    %1997 = vmatprep.subr.mxu0 0.0
    %1998 = vmatpush1.msra.mxu0 0.0
    %1999 = vmatprep.subr.mxu0 0.0
    %2000 = vmatpush1.msra.mxu0 0.0
    %2001 = vmatprep.subr.mxu0 0.0
    %2002 = vmatpush1.msra.mxu0 0.0
    %2003 = vmatprep.subr.mxu0 0.0
    %2004 = vmatpush1.msra.mxu0 0.0
    %2005 = vmatprep.subr.mxu0 0.0
    %2006 = vmatpush1.msra.mxu0 0.0
    %2007 = vmatprep.subr.mxu0 0.0
    %2008 = vmatpush1.msra.mxu0 0.0
    %2009 = vmatprep.subr.mxu0 0.0
    %2010 = vmatpush1.msra.mxu0 0.0
    %2011 = vmatprep.subr.mxu0 0.0
    %2012 = vmatpush1.msra.mxu0 0.0
    %2013 = vmatprep.subr.mxu0 0.0
    %2014 = vmatpush1.msra.mxu0 0.0
    %2015 = vmatprep.subr.mxu0 0.0
    %2016 = vmatpush1.msra.mxu0 %v337
    %2017 = vmatprep.subr.mxu0 0.0
    %2018 = vmatpush1.msra.mxu0 %v336
    %2019 = vmatprep.subr.mxu0 0.0
    %2020 = vmatpush1.msra.mxu0 %v335
    %2021 = vmatprep.subr.mxu0 0.0
    %2022 = vmatpush1.msra.mxu0 %v334
    %2023 = vmatprep.subr.mxu0 0.0
    %2024 = vmatpush2.msra.mxu0 0.0
    %2025 = vmatprep.subr.mxu0 0.0
    %2026 = vmatpush2.msra.mxu0 0.0
    %2027 = vmatprep.subr.mxu0 0.0
    %2028 = vmatpush2.msra.mxu0 0.0
    %2029 = vmatprep.subr.mxu0 0.0
    %2030 = vmatpush2.msra.mxu0 0.0
    %2031 = vmatprep.subr.mxu0 0.0
    %2032 = vmatpush2.msra.mxu0 0.0
    %2033 = vmatprep.subr.mxu0 0.0
    %2034 = vmatpush2.msra.mxu0 0.0
    %2035 = vmatprep.subr.mxu0 0.0
    %2036 = vmatpush2.msra.mxu0 0.0
    %2037 = vmatprep.subr.mxu0 0.0
    %2038 = vmatpush2.msra.mxu0 0.0
    %2039 = vmatprep.subr.mxu0 0.0
    %2040 = vmatpush2.msra.mxu0 0.0
    %2041 = vmatprep.subr.mxu0 0.0
    %2042 = vmatpush2.msra.mxu0 0.0
    %2043 = vmatprep.subr.mxu0 0.0
    %2044 = vmatpush2.msra.mxu0 0.0
    %2045 = vmatprep.subr.mxu0 0.0
    %2046 = vmatpush2.msra.mxu0 0.0
    %2047 = vmatprep.subr.mxu0 0.0
    %2048 = vmatpush2.msra.mxu0 0.0
    %2049 = vmatprep.subr.mxu0 0.0
    %2050 = vmatpush2.msra.mxu0 0.0
    %2051 = vmatprep.subr.mxu0 0.0
    %2052 = vmatpush2.msra.mxu0 0.0
    %2053 = vmatprep.subr.mxu0 0.0
    %2054 = vmatpush2.msra.mxu0 0.0
    %2055 = vmatprep.mubr.f32.mxu0 0.0
    %2056 = vmatmul.mubr.f32.gmra.mxu0 %v1849
    %v2057 = vpop.f32.mrf.mxu0
    %v2058 = vadd.f32 %v356, %v2057
    %v2059 = vpop.f32.mrf.mxu0
    %2060 = vdwg.mxu0
    %v2062 = vrot.slane %v1918, 2
    %v2064 = vadd.f32 %v142, %v2062
    %v2065 = vxor.u32 %v2064, 2147483648
    %v2066 = vmul.f32 %v2065, 1.442695
    %v2067 = vpow.pop %v2066
    %v2068 = vadd.f32 %v2067, 1.0
    %v2069 = vrcp.pop %v2068
    %v2070 = vmul.f32 1.0, %v2069
    %v2072 = vrot.slane %v1988, 2
    %v2074 = vadd.f32 %v233, %v2072
    %v2075 = vxor.u32 %v2074, 2147483648
    %v2076 = vmul.f32 %v2075, 1.442695
    %v2077 = vpow.pop %v2076
    %v2078 = vadd.f32 %v2077, 1.0
    %v2079 = vrcp.pop %v2078
    %v2080 = vmul.f32 1.0, %v2079
    %v2082 = vrot.slane %v2058, 2
    %v2084 = vmul.f32 %v2070, %v2082
    %v2085 = vadd.f32 %v321, %v2084
    %v2086 = vtanh.pop %v2085
    %v2088 = vrot.slane %v2086, 2
    %v2090 = vsub.f32 %v1846, %v2088
    %v2092 = vrot.slane %v2090, 6
    %v2094 = vmul.f32 %v2080, %v2092
    %v2095 = vadd.f32 %v2086, %v2094
    %v2096 = vld [vmem:[%s5] sm:$0xff]
    %v2097 = vld [vmem:[%s5 + $0x8] sm:$0xff]
    %v2098 = vld [vmem:[%s5 + $0x10] sm:$0xff]
    %v2099 = vld [vmem:[%s5 + $0x18] sm:$0xff]
    %v2100 = vld [vmem:[%s6] sm:$0x1]
    %v2102 = vlaneseq
    %v2103 = vshrl.u32 %v2102, 7
    %v2104 = vsub.s32 0, %v2103
    %v2105 = vrot.slane %v2100, %v2104
    %v2108 = vrot.slane %v2095, 6
    %v2109 = vsel %vm363, %v2108, 0
    %2111 = vmatprep.subr.mxu0 0.0
    %2112 = vmatpush1.msra.mxu0 0.0
    %2113 = vmatprep.subr.mxu0 0.0
    %2114 = vmatpush1.msra.mxu0 0.0
    %2115 = vmatprep.subr.mxu0 0.0
    %2116 = vmatpush1.msra.mxu0 0.0
    %2117 = vmatprep.subr.mxu0 0.0
    %2118 = vmatpush1.msra.mxu0 0.0
    %2119 = vmatprep.subr.mxu0 0.0
    %2120 = vmatpush1.msra.mxu0 0.0
    %2121 = vmatprep.subr.mxu0 0.0
    %2122 = vmatpush1.msra.mxu0 0.0
    %2123 = vmatprep.subr.mxu0 0.0
    %2124 = vmatpush1.msra.mxu0 0.0
    %2125 = vmatprep.subr.mxu0 0.0
    %2126 = vmatpush1.msra.mxu0 0.0
    %2127 = vmatprep.subr.mxu0 0.0
    %2128 = vmatpush1.msra.mxu0 0.0
    %2129 = vmatprep.subr.mxu0 0.0
    %2130 = vmatpush1.msra.mxu0 0.0
    %2131 = vmatprep.subr.mxu0 0.0
    %2132 = vmatpush1.msra.mxu0 0.0
    %2133 = vmatprep.subr.mxu0 0.0
    %2134 = vmatpush1.msra.mxu0 0.0
    %2135 = vmatprep.subr.mxu0 0.0
    %2136 = vmatpush1.msra.mxu0 %v2099
    %2137 = vmatprep.subr.mxu0 0.0
    %2138 = vmatpush1.msra.mxu0 %v2098
    %2139 = vmatprep.subr.mxu0 0.0
    %2140 = vmatpush1.msra.mxu0 %v2097
    %2141 = vmatprep.subr.mxu0 0.0
    %2142 = vmatpush1.msra.mxu0 %v2096
    %2143 = vmatprep.subr.mxu0 0.0
    %2144 = vmatpush2.msra.mxu0 0.0
    %2145 = vmatprep.subr.mxu0 0.0
    %2146 = vmatpush2.msra.mxu0 0.0
    %2147 = vmatprep.subr.mxu0 0.0
    %2148 = vmatpush2.msra.mxu0 0.0
    %2149 = vmatprep.subr.mxu0 0.0
    %2150 = vmatpush2.msra.mxu0 0.0
    %2151 = vmatprep.subr.mxu0 0.0
    %2152 = vmatpush2.msra.mxu0 0.0
    %2153 = vmatprep.subr.mxu0 0.0
    %2154 = vmatpush2.msra.mxu0 0.0
    %2155 = vmatprep.subr.mxu0 0.0
    %2156 = vmatpush2.msra.mxu0 0.0
    %2157 = vmatprep.subr.mxu0 0.0
    %2158 = vmatpush2.msra.mxu0 0.0
    %2159 = vmatprep.subr.mxu0 0.0
    %2160 = vmatpush2.msra.mxu0 0.0
    %2161 = vmatprep.subr.mxu0 0.0
    %2162 = vmatpush2.msra.mxu0 0.0
    %2163 = vmatprep.subr.mxu0 0.0
    %2164 = vmatpush2.msra.mxu0 0.0
    %2165 = vmatprep.subr.mxu0 0.0
    %2166 = vmatpush2.msra.mxu0 0.0
    %2167 = vmatprep.subr.mxu0 0.0
    %2168 = vmatpush2.msra.mxu0 0.0
    %2169 = vmatprep.subr.mxu0 0.0
    %2170 = vmatpush2.msra.mxu0 0.0
    %2171 = vmatprep.subr.mxu0 0.0
    %2172 = vmatpush2.msra.mxu0 0.0
    %2173 = vmatprep.subr.mxu0 0.0
    %2174 = vmatpush2.msra.mxu0 0.0
    %2175 = vmatprep.mubr.f32.mxu0 0.0
    %2176 = vmatmul.mubr.f32.gmra.mxu0 %v2109
    %v2177 = vpop.f32.mrf.mxu0
    %v2178 = vadd.f32 %v2105, %v2177
    %v2179 = vpop.f32.mrf.mxu0
    %2180 = vdwg.mxu0
    %v2181 = vmax.f32 %v2178, 0.0
    %v2182 = vld [vmem:[%s7] sm:$0xff]
    %v2183 = vld [vmem:[%s7 + $0x8] sm:$0xff]
    %v2184 = vld [vmem:[%s8] sm:$0x1]
    %v2186 = vlaneseq
    %v2187 = vshrl.u32 %v2186, 7
    %v2188 = vsub.s32 0, %v2187
    %v2189 = vrot.slane %v2184, %v2188
    %vm2191 = vcmask 130048
    %v2193 = vsel %vm2191, %v2181, 0
    %2195 = vmatprep.subr.mxu0 0.0
    %2196 = vmatpush1.msra.mxu0 0.0
    %2197 = vmatprep.subr.mxu0 0.0
    %2198 = vmatpush1.msra.mxu0 0.0
    %2199 = vmatprep.subr.mxu0 0.0
    %2200 = vmatpush1.msra.mxu0 0.0
    %2201 = vmatprep.subr.mxu0 0.0
    %2202 = vmatpush1.msra.mxu0 0.0
    %2203 = vmatprep.subr.mxu0 0.0
    %2204 = vmatpush1.msra.mxu0 0.0
    %2205 = vmatprep.subr.mxu0 0.0
    %2206 = vmatpush1.msra.mxu0 0.0
    %2207 = vmatprep.subr.mxu0 0.0
    %2208 = vmatpush1.msra.mxu0 0.0
    %2209 = vmatprep.subr.mxu0 0.0
    %2210 = vmatpush1.msra.mxu0 0.0
    %2211 = vmatprep.subr.mxu0 0.0
    %2212 = vmatpush1.msra.mxu0 0.0
    %2213 = vmatprep.subr.mxu0 0.0
    %2214 = vmatpush1.msra.mxu0 0.0
    %2215 = vmatprep.subr.mxu0 0.0
    %2216 = vmatpush1.msra.mxu0 0.0
    %2217 = vmatprep.subr.mxu0 0.0
    %2218 = vmatpush1.msra.mxu0 0.0
    %2219 = vmatprep.subr.mxu0 0.0
    %2220 = vmatpush1.msra.mxu0 0.0
    %2221 = vmatprep.subr.mxu0 0.0
    %2222 = vmatpush1.msra.mxu0 0.0
    %2223 = vmatprep.subr.mxu0 0.0
    %2224 = vmatpush1.msra.mxu0 %v2183
    %2225 = vmatprep.subr.mxu0 0.0
    %2226 = vmatpush1.msra.mxu0 %v2182
    %2227 = vmatprep.subr.mxu0 0.0
    %2228 = vmatpush2.msra.mxu0 0.0
    %2229 = vmatprep.subr.mxu0 0.0
    %2230 = vmatpush2.msra.mxu0 0.0
    %2231 = vmatprep.subr.mxu0 0.0
    %2232 = vmatpush2.msra.mxu0 0.0
    %2233 = vmatprep.subr.mxu0 0.0
    %2234 = vmatpush2.msra.mxu0 0.0
    %2235 = vmatprep.subr.mxu0 0.0
    %2236 = vmatpush2.msra.mxu0 0.0
    %2237 = vmatprep.subr.mxu0 0.0
    %2238 = vmatpush2.msra.mxu0 0.0
    %2239 = vmatprep.subr.mxu0 0.0
    %2240 = vmatpush2.msra.mxu0 0.0
    %2241 = vmatprep.subr.mxu0 0.0
    %2242 = vmatpush2.msra.mxu0 0.0
    %2243 = vmatprep.subr.mxu0 0.0
    %2244 = vmatpush2.msra.mxu0 0.0
    %2245 = vmatprep.subr.mxu0 0.0
    %2246 = vmatpush2.msra.mxu0 0.0
    %2247 = vmatprep.subr.mxu0 0.0
    %2248 = vmatpush2.msra.mxu0 0.0
    %2249 = vmatprep.subr.mxu0 0.0
    %2250 = vmatpush2.msra.mxu0 0.0
    %2251 = vmatprep.subr.mxu0 0.0
    %2252 = vmatpush2.msra.mxu0 0.0
    %2253 = vmatprep.subr.mxu0 0.0
    %2254 = vmatpush2.msra.mxu0 0.0
    %2255 = vmatprep.subr.mxu0 0.0
    %2256 = vmatpush2.msra.mxu0 0.0
    %2257 = vmatprep.subr.mxu0 0.0
    %2258 = vmatpush2.msra.mxu0 0.0
    %2259 = vmatprep.mubr.f32.mxu0 0.0
    %2260 = vmatmul.mubr.f32.gmra.mxu0 %v2193
    %v2261 = vpop.f32.mrf.mxu0
    %v2262 = vadd.f32 %v2189, %v2261
    %v2263 = vpop.f32.mrf.mxu0
    %2264 = vdwg.mxu0
    %vm2265 = vcmask 25600
    %v2266 = vsel %vm2265, %v2262, -inf
    %2267 = vmax.xlane.f32.xlu0 %v2266
    %v2268 = vpop.xlane.xlu0 %2267
    %v2269 = vsub.f32 %v2262, %v2268
    %v2270 = vmul.f32 %v2269, 1.442695
    %v2271 = vpow.pop %v2270
    %v2272 = vsel %vm2265, %v2271, 0.0
    %2273 = vadd.xlane.f32.xlu0 %v2272
    %v2274 = vpop.xlane.xlu0 %2273
    %v2275 = vlog2.pop %v2274
    %v2276 = vmul.f32 %v2275, 0.6931472
    %v2277 = vadd.f32 %v2276, %v2268
    %v2278 = vsub.f32 %v2262, %v2277
    %2279 = vst.msk [vmem:[#allocation5] sm:$0x3] %vm2265, %v2278
    // Predicated region
    $region42: #{tpu_custom_call.1} parent=1 // pred_check
      _
    $region43: #{tpu_custom_call.1} parent=1 // pred_check_branch
      %2281 = sbr.rel (0) target = $region45
    $region44: #{tpu_custom_call.1} parent=1 // pred_region
      %s2283 = ssub.s32 32, 32
      %2284 = vsyncadd [#allocation4], %s2283
      %s2286 = sshll.u32 [#allocation5], 4
      %s2287 = int_to_ptr.vmem [resolvable:$true] %s2286
      %2289 = dma.vmem_to_hbm [thread:$0]  %s2287, 32, %s9, [#allocation4]
    $region45: #{tpu_custom_call.1} parent=1 // pred_fallthru
      _
    // Predicated region
    $region46: #{tpu_custom_call.1} parent=1 // pred_check
      _
    $region47: #{tpu_custom_call.1} parent=1 // pred_check_branch
      %2291 = sbr.rel (0) target = $region49
    $region48: #{tpu_custom_call.1} parent=1 // pred_region
      %2292 = dma.done [#allocation4], 32
    $region49: #{tpu_custom_call.1} parent=1 // pred_fallthru
      _
    %2293 = vsyncpa [#allocation3], 1
    %2294 = vsyncpa [#allocation4], 1

</llo_original>
